<compile_context>
chip_gen: v7x
topology: tpu7x:2x2x1
jax: 0.10.0
libtpu: 0.0.40
codegen_flags: <defaults>
</compile_context>

<pallas_src>
import functools

import jax
import jax.numpy as jnp
from jax.experimental import pallas as pl
from jax.experimental.pallas import tpu as pltpu


def _round_up(x, m):
    return ((x + m - 1) // m) * m


def _contrastive_kernel(x_ref, w1_ref, b1_ref, w2_ref, b2_ref, wa_ref, ba_ref,
                        out_ref, *, n_aspects, n_classes):
    cdt = w1_ref.dtype

    # Input tile [TB, D_in]; cast to the matmul dtype here so the f32 input is
    # read from HBM once (no separate wrapper-side cast/pad pass).
    x = x_ref[...].astype(cdt)

    # fc1 + ReLU   (W1: [D_in, H], b1: [1, H]); f32 accumulation on the MXU.
    h1 = jnp.dot(x, w1_ref[...], preferred_element_type=jnp.float32) + b1_ref[...]
    h1 = jnp.maximum(h1, 0.0).astype(cdt)

    # fc2 + ReLU   (W2: [H, H//2], b2: [1, H//2])
    h2 = jnp.dot(h1, w2_ref[...], preferred_element_type=jnp.float32) + b2_ref[...]
    h2 = jnp.maximum(h2, 0.0).astype(cdt)

    # All aspect heads in ONE matmul: [TB, H//2] @ [H//2, A*C] (aspect-major cols).
    logits = jnp.dot(h2, wa_ref[...], preferred_element_type=jnp.float32) + ba_ref[...]

    rows, c = logits.shape[0], n_classes

    def seg_bcast(reduce_fn, arr):
        # Per-aspect reduction on the narrow lane slices, broadcast back to the
        # full [TB, A*C] slab (so elementwise/EUP work runs once, full-width).
        return jnp.concatenate(
            [jnp.broadcast_to(reduce_fn(arr[:, a * c:(a + 1) * c]), (rows, c))
             for a in range(n_aspects)], axis=-1)

    # Per-aspect softmax, but subtract / exp / divide each run ONCE on the slab.
    m_slab = seg_bcast(lambda t: jnp.max(t, axis=-1, keepdims=True), logits)
    e = jnp.exp(logits - m_slab)                                   # ONE exp
    s_slab = seg_bcast(lambda t: jnp.sum(t, axis=-1, keepdims=True), e)
    # Exact division (not approx reciprocal): every row sums to 1 to f32 accuracy.
    out_ref[...] = (e / s_slab).astype(out_ref.dtype)              # ONE divide, ONE store


def contrastive_forward(embeddings, w1, b1, w2, b2, wa, ba, *,
                        block_b=1024, compute_dtype=jnp.bfloat16,
                        out_dtype=jnp.float32):
    """embeddings: [B, D_in]; w1: [D_in, H]; b1: [H]; w2: [H, H//2]; b2: [H//2];
       wa: [A, H//2, C]; ba: [A, C].  Returns [A, B, C] softmax probabilities."""
    B, D = embeddings.shape
    H = w1.shape[1]
    A, H2, C = wa.shape
    AC = A * C

    w_isz = jnp.dtype(compute_dtype).itemsize
    x_isz = jnp.dtype(embeddings.dtype).itemsize
    o_isz = jnp.dtype(out_dtype).itemsize
    sub = max(8, 32 // w_isz)                 # sublane multiple: 8 (f32) / 16 (bf16)

    # --- generation-aware VMEM budget (128 MiB on v5e/v6e, 64 MiB on v7x) ---
    try:
        vmem_cap = int(pltpu.get_tpu_info().vmem_capacity_bytes)
    except Exception:
        vmem_cap = 64 * 1024 * 1024           # conservative (v7x-sized) fallback
    vmem_limit = min(96 * 1024 * 1024, max(32 * 1024 * 1024, (vmem_cap * 3) // 4))

    # Resident weights (budgeted as double-buffered even though single is requested).
    weight_bytes = (D * H + H * H2 + H2 * AC) * w_isz + (H + H2 + AC) * 4
    # Per batch row: double-buffered x tile + double-buffered out tile + f32
    # intermediates (h1, h2, logits / e / max / sum slabs).
    per_row = 2 * D * x_isz + 2 * AC * o_isz + (H + H2 + 6 * AC) * 4
    tile_budget = vmem_limit - 2 * weight_bytes - (2 << 20)
    tb_cap = max(sub, (tile_budget // per_row) // sub * sub)

    tb = max(sub, (min(block_b, tb_cap) // sub) * sub)
    if tb >= B:
        # Whole batch fits one tile: split into two so the grid has >= 2 steps and
        # dimension_semantics=("parallel",) can shard across both TCs on v7x.
        tb = _round_up((B + 1) // 2, sub) if B > sub else B
    n_tiles = pl.cdiv(B, tb)                  # ragged last tile handled by Pallas (no input pad)

    # Flatten aspect heads: [A, H//2, C] -> [H//2, A*C] (aspect-major columns).
    wa_flat = jnp.transpose(wa, (1, 0, 2)).reshape(H2, AC).astype(compute_dtype)
    ba_flat = ba.reshape(1, AC).astype(jnp.float32)

    kernel = functools.partial(_contrastive_kernel, n_aspects=A, n_classes=C)

    cost = pl.CostEstimate(
        flops=2 * B * (D * H + H * H2 + H2 * AC),
        transcendentals=B * AC,
        bytes_accessed=B * D * x_isz + weight_bytes + B * AC * o_isz)

    def build(single_buffer_weights):
        if single_buffer_weights:
            def resident(shape):
                return pl.BlockSpec(shape, lambda i: (0,) * len(shape),
                                    pipeline_mode=pl.Buffered(1))
        else:
            def resident(shape):
                return pl.BlockSpec(shape, lambda i: (0,) * len(shape))
        return pl.pallas_call(
            kernel,
            out_shape=jax.ShapeDtypeStruct((B, AC), out_dtype),
            grid=(n_tiles,),
            in_specs=[
                pl.BlockSpec((tb, D), lambda i: (i, 0)),   # x: tiled on batch
                resident((D, H)),                          # w1 (resident)
                resident((1, H)),                          # b1
                resident((H, H2)),                         # w2
                resident((1, H2)),                         # b2
                resident((H2, AC)),                        # fused aspect weights
                resident((1, AC)),                         # fused aspect biases
            ],
            out_specs=pl.BlockSpec((tb, AC), lambda i: (i, 0)),
            compiler_params=pltpu.CompilerParams(
                dimension_semantics=("parallel",),
                vmem_limit_bytes=int(vmem_limit)),
            cost_estimate=cost,
        )

    args = (embeddings,
            w1.astype(compute_dtype), b1.reshape(1, H).astype(jnp.float32),
            w2.astype(compute_dtype), b2.reshape(1, H2).astype(jnp.float32),
            wa_flat, ba_flat)
    try:
        out = build(True)(*args)      # single-buffered resident weights
    except Exception:
        out = build(False)(*args)     # this JAX/Mosaic build rejects pipeline_mode

    # [B, A*C] -> [A, B, C] to mirror the module's per-aspect outputs.  Consumers
    # that can take the kernel-native [B, A, C] view should use
    # out.reshape(B, A, C) and skip this transpose (it is an extra HBM pass).
    return jnp.transpose(out.reshape(B, A, C), (1, 0, 2))


def init_params(key, input_dim, hidden_dim, n_classes, max_aspects):
    """PyTorch-Linear-style init (uniform +/- 1/sqrt(fan_in)), weights stored
       pre-transposed as [in, out]."""
    ks = jax.random.split(key, 6)
    h2 = hidden_dim // 2

    def lin(kw, kb, fan_in, fan_out):
        bound = 1.0 / jnp.sqrt(jnp.float32(fan_in))
        w = jax.random.uniform(kw, (fan_in, fan_out), jnp.float32, -bound, bound)
        b = jax.random.uniform(kb, (fan_out,), jnp.float32, -bound, bound)
        return w, b

    w1, b1 = lin(ks[0], ks[1], input_dim, hidden_dim)
    w2, b2 = lin(ks[2], ks[3], hidden_dim, h2)

    bound = 1.0 / jnp.sqrt(jnp.float32(h2))
    wa = jax.random.uniform(ks[4], (max_aspects, h2, n_classes), jnp.float32, -bound, bound)
    ba = jax.random.uniform(ks[5], (max_aspects, n_classes), jnp.float32, -bound, bound)
    return w1, b1, w2, b2, wa, ba


if __name__ == "__main__":
    # Small, module-consistent shapes.  With the default block_b the auto-tiler
    # splits B=64 into two tiles of 32 (>= 2 grid steps for megacore).
    B, INPUT_DIM, HIDDEN_DIM, N_CLASSES, MAX_ASPECTS = 64, 32, 32, 8, 6

    key = jax.random.PRNGKey(0)
    k_x, k_p = jax.random.split(key)
    embeddings = jax.random.normal(k_x, (B, INPUT_DIM), jnp.float32)
    params = init_params(k_p, INPUT_DIM, HIDDEN_DIM, N_CLASSES, MAX_ASPECTS)

    probs = contrastive_forward(embeddings, *params)       # [A, B, C]
    probs = jax.block_until_ready(probs)

    assert probs.shape == (MAX_ASPECTS, B, N_CLASSES)

    # Exact normalization -> rows are valid probability distributions.
    row_sums = jnp.sum(probs, axis=-1)
    assert bool(jnp.all(jnp.abs(row_sums - 1.0) < 1e-3)), "softmax rows must sum to 1"

    # Reference with the same bf16-operand / f32-accumulate scheme as the kernel.
    w1, b1, w2, b2, wa, ba = params
    cdt = jnp.bfloat16
    xr = embeddings.astype(cdt)
    h1 = jnp.maximum(
        jnp.dot(xr, w1.astype(cdt), preferred_element_type=jnp.float32) + b1, 0.0
    ).astype(cdt)
    h2 = jnp.maximum(
        jnp.dot(h1, w2.astype(cdt), preferred_element_type=jnp.float32) + b2, 0.0
    ).astype(cdt)
    logits = jnp.einsum("bh,ahc->abc", h2, wa.astype(cdt),
                        preferred_element_type=jnp.float32) + ba[:, None, :]
    ref = jax.nn.softmax(logits, axis=-1)
    assert bool(jnp.max(jnp.abs(ref - probs)) < 2e-3)

    # Loose sanity check against a pure-f32 reference of the original module
    # (bf16 matmul operands introduce ~1e-2-scale differences).
    h1f = jnp.maximum(embeddings @ w1 + b1, 0.0)
    h2f = jnp.maximum(h1f @ w2 + b2, 0.0)
    ref32 = jax.nn.softmax(jnp.einsum("bh,ahc->abc", h2f, wa) + ba[:, None, :], axis=-1)
    assert bool(jnp.max(jnp.abs(ref32 - probs)) < 5e-2)

    print("KERNEL_OK")
</pallas_src>

<mosaic_0001>
module attributes {stable_mosaic.version = 11 : i64} {
  func.func @_contrastive_kernel(%arg0: i32, %arg1: memref<32x32xf32, #tpu.memory_space<vmem>>, %arg2: memref<32x32xbf16, #tpu.memory_space<vmem>>, %arg3: memref<1x32xf32, #tpu.memory_space<vmem>>, %arg4: memref<32x16xbf16, #tpu.memory_space<vmem>>, %arg5: memref<1x16xf32, #tpu.memory_space<vmem>>, %arg6: memref<16x48xbf16, #tpu.memory_space<vmem>>, %arg7: memref<1x48xf32, #tpu.memory_space<vmem>>, %arg8: memref<32x48xf32, #tpu.memory_space<vmem>>) attributes {dimension_semantics = [#tpu.dimension_semantics<parallel>], iteration_bounds = array<i64: 2>, scalar_prefetch = 0 : i64, scratch_operands = 0 : i64, tpu.core_type = #tpu.core_type<tc>, window_params = [{transform_indices = @transform_0, window_bounds = array<i64: 32, 32>}, {pipeline_mode = #tpu.pipeline_mode<synchronous>, transform_indices = @transform_1, window_bounds = array<i64: 32, 32>}, {pipeline_mode = #tpu.pipeline_mode<synchronous>, transform_indices = @transform_2, window_bounds = array<i64: 1, 32>}, {pipeline_mode = #tpu.pipeline_mode<synchronous>, transform_indices = @transform_3, window_bounds = array<i64: 32, 16>}, {pipeline_mode = #tpu.pipeline_mode<synchronous>, transform_indices = @transform_4, window_bounds = array<i64: 1, 16>}, {pipeline_mode = #tpu.pipeline_mode<synchronous>, transform_indices = @transform_5, window_bounds = array<i64: 16, 48>}, {pipeline_mode = #tpu.pipeline_mode<synchronous>, transform_indices = @transform_6, window_bounds = array<i64: 1, 48>}, {transform_indices = @transform_7, window_bounds = array<i64: 32, 48>}]} {
    %c0 = arith.constant 0 : index
    %c0_0 = arith.constant 0 : index
    %0 = vector.load %arg1[%c0, %c0_0] : memref<32x32xf32, #tpu.memory_space<vmem>>, vector<32x32xf32>
    %1 = arith.truncf %0 : vector<32x32xf32> to vector<32x32xbf16>
    %c0_1 = arith.constant 0 : index
    %c0_2 = arith.constant 0 : index
    %2 = vector.load %arg2[%c0_1, %c0_2] : memref<32x32xbf16, #tpu.memory_space<vmem>>, vector<32x32xbf16>
    %cst = arith.constant dense<0.000000e+00> : vector<32x32xf32>
    %3 = tpu.matmul %1, %2, %cst {dimension_numbers = #tpu.dot_dimension_numbers<[1], [0], [0], [1], [0, 0, 1, 1], [], []>} : vector<32x32xbf16>, vector<32x32xbf16>, vector<32x32xf32> -> vector<32x32xf32>
    %c0_3 = arith.constant 0 : index
    %c0_4 = arith.constant 0 : index
    %4 = vector.load %arg3[%c0_3, %c0_4] : memref<1x32xf32, #tpu.memory_space<vmem>>, vector<1x32xf32>
    %5 = vector.broadcast %4 : vector<1x32xf32> to vector<32x32xf32>
    %6 = arith.addf %3, %5 : vector<32x32xf32>
    %cst_5 = arith.constant 0.000000e+00 : f32
    %7 = vector.broadcast %cst_5 : f32 to vector<32x32xf32>
    %8 = arith.maximumf %6, %7 : vector<32x32xf32>
    %9 = arith.truncf %8 : vector<32x32xf32> to vector<32x32xbf16>
    %c0_6 = arith.constant 0 : index
    %c0_7 = arith.constant 0 : index
    %10 = vector.load %arg4[%c0_6, %c0_7] : memref<32x16xbf16, #tpu.memory_space<vmem>>, vector<32x16xbf16>
    %cst_8 = arith.constant dense<0.000000e+00> : vector<32x16xf32>
    %11 = tpu.matmul %9, %10, %cst_8 {dimension_numbers = #tpu.dot_dimension_numbers<[1], [0], [0], [1], [0, 0, 1, 1], [], []>} : vector<32x32xbf16>, vector<32x16xbf16>, vector<32x16xf32> -> vector<32x16xf32>
    %c0_9 = arith.constant 0 : index
    %c0_10 = arith.constant 0 : index
    %12 = vector.load %arg5[%c0_9, %c0_10] : memref<1x16xf32, #tpu.memory_space<vmem>>, vector<1x16xf32>
    %13 = vector.broadcast %12 : vector<1x16xf32> to vector<32x16xf32>
    %14 = arith.addf %11, %13 : vector<32x16xf32>
    %cst_11 = arith.constant 0.000000e+00 : f32
    %15 = vector.broadcast %cst_11 : f32 to vector<32x16xf32>
    %16 = arith.maximumf %14, %15 : vector<32x16xf32>
    %17 = arith.truncf %16 : vector<32x16xf32> to vector<32x16xbf16>
    %c0_12 = arith.constant 0 : index
    %c0_13 = arith.constant 0 : index
    %18 = vector.load %arg6[%c0_12, %c0_13] : memref<16x48xbf16, #tpu.memory_space<vmem>>, vector<16x48xbf16>
    %cst_14 = arith.constant dense<0.000000e+00> : vector<32x48xf32>
    %19 = tpu.matmul %17, %18, %cst_14 {dimension_numbers = #tpu.dot_dimension_numbers<[1], [0], [0], [1], [0, 0, 1, 1], [], []>} : vector<32x16xbf16>, vector<16x48xbf16>, vector<32x48xf32> -> vector<32x48xf32>
    %c0_15 = arith.constant 0 : index
    %c0_16 = arith.constant 0 : index
    %20 = vector.load %arg7[%c0_15, %c0_16] : memref<1x48xf32, #tpu.memory_space<vmem>>, vector<1x48xf32>
    %21 = vector.broadcast %20 : vector<1x48xf32> to vector<32x48xf32>
    %22 = arith.addf %19, %21 : vector<32x48xf32>
    %23 = vector.extract_strided_slice %22 {offsets = [0, 0], sizes = [32, 8], strides = [1, 1]} : vector<32x48xf32> to vector<32x8xf32>
    %cst_17 = arith.constant dense<0xFF800000> : vector<32xf32>
    %24 = vector.multi_reduction <maximumf>, %23, %cst_17 [1] : vector<32x8xf32> to vector<32xf32>
    %25 = vector.shape_cast %24 : vector<32xf32> to vector<32x1xf32>
    %26 = vector.shape_cast %25 : vector<32x1xf32> to vector<32x1xf32>
    %27 = vector.broadcast %26 : vector<32x1xf32> to vector<32x8xf32>
    %28 = vector.extract_strided_slice %22 {offsets = [0, 8], sizes = [32, 8], strides = [1, 1]} : vector<32x48xf32> to vector<32x8xf32>
    %cst_18 = arith.constant dense<0xFF800000> : vector<32xf32>
    %29 = vector.multi_reduction <maximumf>, %28, %cst_18 [1] : vector<32x8xf32> to vector<32xf32>
    %30 = vector.shape_cast %29 : vector<32xf32> to vector<32x1xf32>
    %31 = vector.shape_cast %30 : vector<32x1xf32> to vector<32x1xf32>
    %32 = vector.broadcast %31 : vector<32x1xf32> to vector<32x8xf32>
    %33 = vector.extract_strided_slice %22 {offsets = [0, 16], sizes = [32, 8], strides = [1, 1]} : vector<32x48xf32> to vector<32x8xf32>
    %cst_19 = arith.constant dense<0xFF800000> : vector<32xf32>
    %34 = vector.multi_reduction <maximumf>, %33, %cst_19 [1] : vector<32x8xf32> to vector<32xf32>
    %35 = vector.shape_cast %34 : vector<32xf32> to vector<32x1xf32>
    %36 = vector.shape_cast %35 : vector<32x1xf32> to vector<32x1xf32>
    %37 = vector.broadcast %36 : vector<32x1xf32> to vector<32x8xf32>
    %38 = vector.extract_strided_slice %22 {offsets = [0, 24], sizes = [32, 8], strides = [1, 1]} : vector<32x48xf32> to vector<32x8xf32>
    %cst_20 = arith.constant dense<0xFF800000> : vector<32xf32>
    %39 = vector.multi_reduction <maximumf>, %38, %cst_20 [1] : vector<32x8xf32> to vector<32xf32>
    %40 = vector.shape_cast %39 : vector<32xf32> to vector<32x1xf32>
    %41 = vector.shape_cast %40 : vector<32x1xf32> to vector<32x1xf32>
    %42 = vector.broadcast %41 : vector<32x1xf32> to vector<32x8xf32>
    %43 = vector.extract_strided_slice %22 {offsets = [0, 32], sizes = [32, 8], strides = [1, 1]} : vector<32x48xf32> to vector<32x8xf32>
    %cst_21 = arith.constant dense<0xFF800000> : vector<32xf32>
    %44 = vector.multi_reduction <maximumf>, %43, %cst_21 [1] : vector<32x8xf32> to vector<32xf32>
    %45 = vector.shape_cast %44 : vector<32xf32> to vector<32x1xf32>
    %46 = vector.shape_cast %45 : vector<32x1xf32> to vector<32x1xf32>
    %47 = vector.broadcast %46 : vector<32x1xf32> to vector<32x8xf32>
    %48 = vector.extract_strided_slice %22 {offsets = [0, 40], sizes = [32, 8], strides = [1, 1]} : vector<32x48xf32> to vector<32x8xf32>
    %cst_22 = arith.constant dense<0xFF800000> : vector<32xf32>
    %49 = vector.multi_reduction <maximumf>, %48, %cst_22 [1] : vector<32x8xf32> to vector<32xf32>
    %50 = vector.shape_cast %49 : vector<32xf32> to vector<32x1xf32>
    %51 = vector.shape_cast %50 : vector<32x1xf32> to vector<32x1xf32>
    %52 = vector.broadcast %51 : vector<32x1xf32> to vector<32x8xf32>
    %53 = tpu.concatenate %27, %32, %37, %42, %47, %52 in 1 : vector<32x8xf32>, vector<32x8xf32>, vector<32x8xf32>, vector<32x8xf32>, vector<32x8xf32>, vector<32x8xf32> -> vector<32x48xf32>
    %54 = arith.subf %22, %53 : vector<32x48xf32>
    %55 = math.exp %54 : vector<32x48xf32>
    %56 = vector.extract_strided_slice %55 {offsets = [0, 0], sizes = [32, 8], strides = [1, 1]} : vector<32x48xf32> to vector<32x8xf32>
    %cst_23 = arith.constant dense<0.000000e+00> : vector<32xf32>
    %57 = vector.multi_reduction <add>, %56, %cst_23 [1] : vector<32x8xf32> to vector<32xf32>
    %58 = vector.shape_cast %57 : vector<32xf32> to vector<32x1xf32>
    %59 = vector.shape_cast %58 : vector<32x1xf32> to vector<32x1xf32>
    %60 = vector.broadcast %59 : vector<32x1xf32> to vector<32x8xf32>
    %61 = vector.extract_strided_slice %55 {offsets = [0, 8], sizes = [32, 8], strides = [1, 1]} : vector<32x48xf32> to vector<32x8xf32>
    %cst_24 = arith.constant dense<0.000000e+00> : vector<32xf32>
    %62 = vector.multi_reduction <add>, %61, %cst_24 [1] : vector<32x8xf32> to vector<32xf32>
    %63 = vector.shape_cast %62 : vector<32xf32> to vector<32x1xf32>
    %64 = vector.shape_cast %63 : vector<32x1xf32> to vector<32x1xf32>
    %65 = vector.broadcast %64 : vector<32x1xf32> to vector<32x8xf32>
    %66 = vector.extract_strided_slice %55 {offsets = [0, 16], sizes = [32, 8], strides = [1, 1]} : vector<32x48xf32> to vector<32x8xf32>
    %cst_25 = arith.constant dense<0.000000e+00> : vector<32xf32>
    %67 = vector.multi_reduction <add>, %66, %cst_25 [1] : vector<32x8xf32> to vector<32xf32>
    %68 = vector.shape_cast %67 : vector<32xf32> to vector<32x1xf32>
    %69 = vector.shape_cast %68 : vector<32x1xf32> to vector<32x1xf32>
    %70 = vector.broadcast %69 : vector<32x1xf32> to vector<32x8xf32>
    %71 = vector.extract_strided_slice %55 {offsets = [0, 24], sizes = [32, 8], strides = [1, 1]} : vector<32x48xf32> to vector<32x8xf32>
    %cst_26 = arith.constant dense<0.000000e+00> : vector<32xf32>
    %72 = vector.multi_reduction <add>, %71, %cst_26 [1] : vector<32x8xf32> to vector<32xf32>
    %73 = vector.shape_cast %72 : vector<32xf32> to vector<32x1xf32>
    %74 = vector.shape_cast %73 : vector<32x1xf32> to vector<32x1xf32>
    %75 = vector.broadcast %74 : vector<32x1xf32> to vector<32x8xf32>
    %76 = vector.extract_strided_slice %55 {offsets = [0, 32], sizes = [32, 8], strides = [1, 1]} : vector<32x48xf32> to vector<32x8xf32>
    %cst_27 = arith.constant dense<0.000000e+00> : vector<32xf32>
    %77 = vector.multi_reduction <add>, %76, %cst_27 [1] : vector<32x8xf32> to vector<32xf32>
    %78 = vector.shape_cast %77 : vector<32xf32> to vector<32x1xf32>
    %79 = vector.shape_cast %78 : vector<32x1xf32> to vector<32x1xf32>
    %80 = vector.broadcast %79 : vector<32x1xf32> to vector<32x8xf32>
    %81 = vector.extract_strided_slice %55 {offsets = [0, 40], sizes = [32, 8], strides = [1, 1]} : vector<32x48xf32> to vector<32x8xf32>
    %cst_28 = arith.constant dense<0.000000e+00> : vector<32xf32>
    %82 = vector.multi_reduction <add>, %81, %cst_28 [1] : vector<32x8xf32> to vector<32xf32>
    %83 = vector.shape_cast %82 : vector<32xf32> to vector<32x1xf32>
    %84 = vector.shape_cast %83 : vector<32x1xf32> to vector<32x1xf32>
    %85 = vector.broadcast %84 : vector<32x1xf32> to vector<32x8xf32>
    %86 = tpu.concatenate %60, %65, %70, %75, %80, %85 in 1 : vector<32x8xf32>, vector<32x8xf32>, vector<32x8xf32>, vector<32x8xf32>, vector<32x8xf32>, vector<32x8xf32> -> vector<32x48xf32>
    %87 = arith.divf %55, %86 : vector<32x48xf32>
    %c0_29 = arith.constant 0 : index
    %c0_30 = arith.constant 0 : index
    %88 = vector.load %arg8[%c0_29, %c0_30] : memref<32x48xf32, #tpu.memory_space<vmem>>, vector<32x48xf32>
    tpu.vector_store %arg8[%c0_29, %c0_30], %87 {strides = array<i32>} : memref<32x48xf32, #tpu.memory_space<vmem>>, vector<32x48xf32>,
    return
  }
  func.func @transform_0(%arg0: i32) -> (i32, i32) {
    %c0_i32 = arith.constant 0 : i32
    %c0_i32_0 = arith.constant 0 : i32
    return %arg0, %c0_i32 : i32, i32
  }
  func.func @transform_1(%arg0: i32) -> (i32, i32) {
    %c0_i32 = arith.constant 0 : i32
    %c0_i32_0 = arith.constant 0 : i32
    %c0_i32_1 = arith.constant 0 : i32
    return %c0_i32, %c0_i32_0 : i32, i32
  }
  func.func @transform_2(%arg0: i32) -> (i32, i32) {
    %c0_i32 = arith.constant 0 : i32
    %c0_i32_0 = arith.constant 0 : i32
    %c0_i32_1 = arith.constant 0 : i32
    return %c0_i32, %c0_i32_0 : i32, i32
  }
  func.func @transform_3(%arg0: i32) -> (i32, i32) {
    %c0_i32 = arith.constant 0 : i32
    %c0_i32_0 = arith.constant 0 : i32
    %c0_i32_1 = arith.constant 0 : i32
    return %c0_i32, %c0_i32_0 : i32, i32
  }
  func.func @transform_4(%arg0: i32) -> (i32, i32) {
    %c0_i32 = arith.constant 0 : i32
    %c0_i32_0 = arith.constant 0 : i32
    %c0_i32_1 = arith.constant 0 : i32
    return %c0_i32, %c0_i32_0 : i32, i32
  }
  func.func @transform_5(%arg0: i32) -> (i32, i32) {
    %c0_i32 = arith.constant 0 : i32
    %c0_i32_0 = arith.constant 0 : i32
    %c0_i32_1 = arith.constant 0 : i32
    return %c0_i32, %c0_i32_0 : i32, i32
  }
  func.func @transform_6(%arg0: i32) -> (i32, i32) {
    %c0_i32 = arith.constant 0 : i32
    %c0_i32_0 = arith.constant 0 : i32
    %c0_i32_1 = arith.constant 0 : i32
    return %c0_i32, %c0_i32_0 : i32, i32
  }
  func.func @transform_7(%arg0: i32) -> (i32, i32) {
    %c0_i32 = arith.constant 0 : i32
    %c0_i32_0 = arith.constant 0 : i32
    return %arg0, %c0_i32 : i32, i32
  }
}

module attributes {stable_mosaic.version = 11 : i64} {
  func.func @_contrastive_kernel(%arg0: i32, %arg1: memref<32x32xf32, #tpu.memory_space<vmem>>, %arg2: memref<32x32xbf16, #tpu.memory_space<vmem>>, %arg3: memref<1x32xf32, #tpu.memory_space<vmem>>, %arg4: memref<32x16xbf16, #tpu.memory_space<vmem>>, %arg5: memref<1x16xf32, #tpu.memory_space<vmem>>, %arg6: memref<16x48xbf16, #tpu.memory_space<vmem>>, %arg7: memref<1x48xf32, #tpu.memory_space<vmem>>, %arg8: memref<32x48xf32, #tpu.memory_space<vmem>>) attributes {dimension_semantics = [#tpu.dimension_semantics<parallel>], iteration_bounds = array<i64: 2>, scalar_prefetch = 0 : i64, scratch_operands = 0 : i64, tpu.core_type = #tpu.core_type<tc>, window_params = [{transform_indices = @transform_0, window_bounds = array<i64: 32, 32>}, {pipeline_mode = #tpu.pipeline_mode<synchronous>, transform_indices = @transform_1, window_bounds = array<i64: 32, 32>}, {pipeline_mode = #tpu.pipeline_mode<synchronous>, transform_indices = @transform_2, window_bounds = array<i64: 1, 32>}, {pipeline_mode = #tpu.pipeline_mode<synchronous>, transform_indices = @transform_3, window_bounds = array<i64: 32, 16>}, {pipeline_mode = #tpu.pipeline_mode<synchronous>, transform_indices = @transform_4, window_bounds = array<i64: 1, 16>}, {pipeline_mode = #tpu.pipeline_mode<synchronous>, transform_indices = @transform_5, window_bounds = array<i64: 16, 48>}, {pipeline_mode = #tpu.pipeline_mode<synchronous>, transform_indices = @transform_6, window_bounds = array<i64: 1, 48>}, {transform_indices = @transform_7, window_bounds = array<i64: 32, 48>}]} {
    %c0 = arith.constant 0 : index
    %c0_0 = arith.constant 0 : index
    %0 = vector.load %arg1[%c0, %c0_0] : memref<32x32xf32, #tpu.memory_space<vmem>>, vector<32x32xf32>
    %1 = arith.truncf %0 : vector<32x32xf32> to vector<32x32xbf16>
    %c0_1 = arith.constant 0 : index
    %c0_2 = arith.constant 0 : index
    %2 = vector.load %arg2[%c0_1, %c0_2] : memref<32x32xbf16, #tpu.memory_space<vmem>>, vector<32x32xbf16>
    %cst = arith.constant dense<0.000000e+00> : vector<32x32xf32>
    %3 = tpu.matmul %1, %2, %cst {dimension_numbers = #tpu.dot_dimension_numbers<[1], [0], [0], [1], [0, 0, 1, 1], [], []>} : vector<32x32xbf16>, vector<32x32xbf16>, vector<32x32xf32> -> vector<32x32xf32>
    %c0_3 = arith.constant 0 : index
    %c0_4 = arith.constant 0 : index
    %4 = vector.load %arg3[%c0_3, %c0_4] : memref<1x32xf32, #tpu.memory_space<vmem>>, vector<1x32xf32>
    %5 = vector.broadcast %4 : vector<1x32xf32> to vector<32x32xf32>
    %6 = arith.addf %3, %5 : vector<32x32xf32>
    %cst_5 = arith.constant 0.000000e+00 : f32
    %7 = vector.broadcast %cst_5 : f32 to vector<32x32xf32>
    %8 = arith.maximumf %6, %7 : vector<32x32xf32>
    %9 = arith.truncf %8 : vector<32x32xf32> to vector<32x32xbf16>
    %c0_6 = arith.constant 0 : index
    %c0_7 = arith.constant 0 : index
    %10 = vector.load %arg4[%c0_6, %c0_7] : memref<32x16xbf16, #tpu.memory_space<vmem>>, vector<32x16xbf16>
    %cst_8 = arith.constant dense<0.000000e+00> : vector<32x16xf32>
    %11 = tpu.matmul %9, %10, %cst_8 {dimension_numbers = #tpu.dot_dimension_numbers<[1], [0], [0], [1], [0, 0, 1, 1], [], []>} : vector<32x32xbf16>, vector<32x16xbf16>, vector<32x16xf32> -> vector<32x16xf32>
    %c0_9 = arith.constant 0 : index
    %c0_10 = arith.constant 0 : index
    %12 = vector.load %arg5[%c0_9, %c0_10] : memref<1x16xf32, #tpu.memory_space<vmem>>, vector<1x16xf32>
    %13 = vector.broadcast %12 : vector<1x16xf32> to vector<32x16xf32>
    %14 = arith.addf %11, %13 : vector<32x16xf32>
    %cst_11 = arith.constant 0.000000e+00 : f32
    %15 = vector.broadcast %cst_11 : f32 to vector<32x16xf32>
    %16 = arith.maximumf %14, %15 : vector<32x16xf32>
    %17 = arith.truncf %16 : vector<32x16xf32> to vector<32x16xbf16>
    %c0_12 = arith.constant 0 : index
    %c0_13 = arith.constant 0 : index
    %18 = vector.load %arg6[%c0_12, %c0_13] : memref<16x48xbf16, #tpu.memory_space<vmem>>, vector<16x48xbf16>
    %cst_14 = arith.constant dense<0.000000e+00> : vector<32x48xf32>
    %19 = tpu.matmul %17, %18, %cst_14 {dimension_numbers = #tpu.dot_dimension_numbers<[1], [0], [0], [1], [0, 0, 1, 1], [], []>} : vector<32x16xbf16>, vector<16x48xbf16>, vector<32x48xf32> -> vector<32x48xf32>
    %c0_15 = arith.constant 0 : index
    %c0_16 = arith.constant 0 : index
    %20 = vector.load %arg7[%c0_15, %c0_16] : memref<1x48xf32, #tpu.memory_space<vmem>>, vector<1x48xf32>
    %21 = vector.broadcast %20 : vector<1x48xf32> to vector<32x48xf32>
    %22 = arith.addf %19, %21 : vector<32x48xf32>
    %23 = vector.extract_strided_slice %22 {offsets = [0, 0], sizes = [32, 8], strides = [1, 1]} : vector<32x48xf32> to vector<32x8xf32>
    %cst_17 = arith.constant dense<0xFF800000> : vector<32xf32>
    %24 = vector.multi_reduction <maximumf>, %23, %cst_17 [1] : vector<32x8xf32> to vector<32xf32>
    %25 = vector.shape_cast %24 : vector<32xf32> to vector<32x1xf32>
    %26 = vector.shape_cast %25 : vector<32x1xf32> to vector<32x1xf32>
    %27 = vector.broadcast %26 : vector<32x1xf32> to vector<32x8xf32>
    %28 = vector.extract_strided_slice %22 {offsets = [0, 8], sizes = [32, 8], strides = [1, 1]} : vector<32x48xf32> to vector<32x8xf32>
    %cst_18 = arith.constant dense<0xFF800000> : vector<32xf32>
    %29 = vector.multi_reduction <maximumf>, %28, %cst_18 [1] : vector<32x8xf32> to vector<32xf32>
    %30 = vector.shape_cast %29 : vector<32xf32> to vector<32x1xf32>
    %31 = vector.shape_cast %30 : vector<32x1xf32> to vector<32x1xf32>
    %32 = vector.broadcast %31 : vector<32x1xf32> to vector<32x8xf32>
    %33 = vector.extract_strided_slice %22 {offsets = [0, 16], sizes = [32, 8], strides = [1, 1]} : vector<32x48xf32> to vector<32x8xf32>
    %cst_19 = arith.constant dense<0xFF800000> : vector<32xf32>
    %34 = vector.multi_reduction <maximumf>, %33, %cst_19 [1] : vector<32x8xf32> to vector<32xf32>
    %35 = vector.shape_cast %34 : vector<32xf32> to vector<32x1xf32>
    %36 = vector.shape_cast %35 : vector<32x1xf32> to vector<32x1xf32>
    %37 = vector.broadcast %36 : vector<32x1xf32> to vector<32x8xf32>
    %38 = vector.extract_strided_slice %22 {offsets = [0, 24], sizes = [32, 8], strides = [1, 1]} : vector<32x48xf32> to vector<32x8xf32>
    %cst_20 = arith.constant dense<0xFF800000> : vector<32xf32>
    %39 = vector.multi_reduction <maximumf>, %38, %cst_20 [1] : vector<32x8xf32> to vector<32xf32>
    %40 = vector.shape_cast %39 : vector<32xf32> to vector<32x1xf32>
    %41 = vector.shape_cast %40 : vector<32x1xf32> to vector<32x1xf32>
    %42 = vector.broadcast %41 : vector<32x1xf32> to vector<32x8xf32>
    %43 = vector.extract_strided_slice %22 {offsets = [0, 32], sizes = [32, 8], strides = [1, 1]} : vector<32x48xf32> to vector<32x8xf32>
    %cst_21 = arith.constant dense<0xFF800000> : vector<32xf32>
    %44 = vector.multi_reduction <maximumf>, %43, %cst_21 [1] : vector<32x8xf32> to vector<32xf32>
    %45 = vector.shape_cast %44 : vector<32xf32> to vector<32x1xf32>
    %46 = vector.shape_cast %45 : vector<32x1xf32> to vector<32x1xf32>
    %47 = vector.broadcast %46 : vector<32x1xf32> to vector<32x8xf32>
    %48 = vector.extract_strided_slice %22 {offsets = [0, 40], sizes = [32, 8], strides = [1, 1]} : vector<32x48xf32> to vector<32x8xf32>
    %cst_22 = arith.constant dense<0xFF800000> : vector<32xf32>
    %49 = vector.multi_reduction <maximumf>, %48, %cst_22 [1] : vector<32x8xf32> to vector<32xf32>
    %50 = vector.shape_cast %49 : vector<32xf32> to vector<32x1xf32>
    %51 = vector.shape_cast %50 : vector<32x1xf32> to vector<32x1xf32>
    %52 = vector.broadcast %51 : vector<32x1xf32> to vector<32x8xf32>
    %53 = tpu.concatenate %27, %32, %37, %42, %47, %52 in 1 : vector<32x8xf32>, vector<32x8xf32>, vector<32x8xf32>, vector<32x8xf32>, vector<32x8xf32>, vector<32x8xf32> -> vector<32x48xf32>
    %54 = arith.subf %22, %53 : vector<32x48xf32>
    %55 = math.exp %54 : vector<32x48xf32>
    %56 = vector.extract_strided_slice %55 {offsets = [0, 0], sizes = [32, 8], strides = [1, 1]} : vector<32x48xf32> to vector<32x8xf32>
    %cst_23 = arith.constant dense<0.000000e+00> : vector<32xf32>
    %57 = vector.multi_reduction <add>, %56, %cst_23 [1] : vector<32x8xf32> to vector<32xf32>
    %58 = vector.shape_cast %57 : vector<32xf32> to vector<32x1xf32>
    %59 = vector.shape_cast %58 : vector<32x1xf32> to vector<32x1xf32>
    %60 = vector.broadcast %59 : vector<32x1xf32> to vector<32x8xf32>
    %61 = vector.extract_strided_slice %55 {offsets = [0, 8], sizes = [32, 8], strides = [1, 1]} : vector<32x48xf32> to vector<32x8xf32>
    %cst_24 = arith.constant dense<0.000000e+00> : vector<32xf32>
    %62 = vector.multi_reduction <add>, %61, %cst_24 [1] : vector<32x8xf32> to vector<32xf32>
    %63 = vector.shape_cast %62 : vector<32xf32> to vector<32x1xf32>
    %64 = vector.shape_cast %63 : vector<32x1xf32> to vector<32x1xf32>
    %65 = vector.broadcast %64 : vector<32x1xf32> to vector<32x8xf32>
    %66 = vector.extract_strided_slice %55 {offsets = [0, 16], sizes = [32, 8], strides = [1, 1]} : vector<32x48xf32> to vector<32x8xf32>
    %cst_25 = arith.constant dense<0.000000e+00> : vector<32xf32>
    %67 = vector.multi_reduction <add>, %66, %cst_25 [1] : vector<32x8xf32> to vector<32xf32>
    %68 = vector.shape_cast %67 : vector<32xf32> to vector<32x1xf32>
    %69 = vector.shape_cast %68 : vector<32x1xf32> to vector<32x1xf32>
    %70 = vector.broadcast %69 : vector<32x1xf32> to vector<32x8xf32>
    %71 = vector.extract_strided_slice %55 {offsets = [0, 24], sizes = [32, 8], strides = [1, 1]} : vector<32x48xf32> to vector<32x8xf32>
    %cst_26 = arith.constant dense<0.000000e+00> : vector<32xf32>
    %72 = vector.multi_reduction <add>, %71, %cst_26 [1] : vector<32x8xf32> to vector<32xf32>
    %73 = vector.shape_cast %72 : vector<32xf32> to vector<32x1xf32>
    %74 = vector.shape_cast %73 : vector<32x1xf32> to vector<32x1xf32>
    %75 = vector.broadcast %74 : vector<32x1xf32> to vector<32x8xf32>
    %76 = vector.extract_strided_slice %55 {offsets = [0, 32], sizes = [32, 8], strides = [1, 1]} : vector<32x48xf32> to vector<32x8xf32>
    %cst_27 = arith.constant dense<0.000000e+00> : vector<32xf32>
    %77 = vector.multi_reduction <add>, %76, %cst_27 [1] : vector<32x8xf32> to vector<32xf32>
    %78 = vector.shape_cast %77 : vector<32xf32> to vector<32x1xf32>
    %79 = vector.shape_cast %78 : vector<32x1xf32> to vector<32x1xf32>
    %80 = vector.broadcast %79 : vector<32x1xf32> to vector<32x8xf32>
    %81 = vector.extract_strided_slice %55 {offsets = [0, 40], sizes = [32, 8], strides = [1, 1]} : vector<32x48xf32> to vector<32x8xf32>
    %cst_28 = arith.constant dense<0.000000e+00> : vector<32xf32>
    %82 = vector.multi_reduction <add>, %81, %cst_28 [1] : vector<32x8xf32> to vector<32xf32>
    %83 = vector.shape_cast %82 : vector<32xf32> to vector<32x1xf32>
    %84 = vector.shape_cast %83 : vector<32x1xf32> to vector<32x1xf32>
    %85 = vector.broadcast %84 : vector<32x1xf32> to vector<32x8xf32>
    %86 = tpu.concatenate %60, %65, %70, %75, %80, %85 in 1 : vector<32x8xf32>, vector<32x8xf32>, vector<32x8xf32>, vector<32x8xf32>, vector<32x8xf32>, vector<32x8xf32> -> vector<32x48xf32>
    %87 = arith.divf %55, %86 : vector<32x48xf32>
    %c0_29 = arith.constant 0 : index
    %c0_30 = arith.constant 0 : index
    %88 = vector.load %arg8[%c0_29, %c0_30] : memref<32x48xf32, #tpu.memory_space<vmem>>, vector<32x48xf32>
    tpu.vector_store %arg8[%c0_29, %c0_30], %87 {strides = array<i32>} : memref<32x48xf32, #tpu.memory_space<vmem>>, vector<32x48xf32>,
    return
  }
  func.func @transform_0(%arg0: i32) -> (i32, i32) {
    %c0_i32 = arith.constant 0 : i32
    %c0_i32_0 = arith.constant 0 : i32
    return %arg0, %c0_i32 : i32, i32
  }
  func.func @transform_1(%arg0: i32) -> (i32, i32) {
    %c0_i32 = arith.constant 0 : i32
    %c0_i32_0 = arith.constant 0 : i32
    %c0_i32_1 = arith.constant 0 : i32
    return %c0_i32, %c0_i32_0 : i32, i32
  }
  func.func @transform_2(%arg0: i32) -> (i32, i32) {
    %c0_i32 = arith.constant 0 : i32
    %c0_i32_0 = arith.constant 0 : i32
    %c0_i32_1 = arith.constant 0 : i32
    return %c0_i32, %c0_i32_0 : i32, i32
  }
  func.func @transform_3(%arg0: i32) -> (i32, i32) {
    %c0_i32 = arith.constant 0 : i32
    %c0_i32_0 = arith.constant 0 : i32
    %c0_i32_1 = arith.constant 0 : i32
    return %c0_i32, %c0_i32_0 : i32, i32
  }
  func.func @transform_4(%arg0: i32) -> (i32, i32) {
    %c0_i32 = arith.constant 0 : i32
    %c0_i32_0 = arith.constant 0 : i32
    %c0_i32_1 = arith.constant 0 : i32
    return %c0_i32, %c0_i32_0 : i32, i32
  }
  func.func @transform_5(%arg0: i32) -> (i32, i32) {
    %c0_i32 = arith.constant 0 : i32
    %c0_i32_0 = arith.constant 0 : i32
    %c0_i32_1 = arith.constant 0 : i32
    return %c0_i32, %c0_i32_0 : i32, i32
  }
  func.func @transform_6(%arg0: i32) -> (i32, i32) {
    %c0_i32 = arith.constant 0 : i32
    %c0_i32_0 = arith.constant 0 : i32
    %c0_i32_1 = arith.constant 0 : i32
    return %c0_i32, %c0_i32_0 : i32, i32
  }
  func.func @transform_7(%arg0: i32) -> (i32, i32) {
    %c0_i32 = arith.constant 0 : i32
    %c0_i32_0 = arith.constant 0 : i32
    return %arg0, %c0_i32 : i32, i32
  }
}

</mosaic_0001>

<llo_original>
// kernel: tpu_custom_call.1
$region0: #{tpu_custom_call.1}
  #allocation0 [shape = 'u32[]', space=smem, size = 0x4, offset = 0x4, fixed_abs, tag = 'smem constant byte address 0x4 - core index']
  #allocation1 [shape = 'u32[144,128]{1,0:T(1,128)}', space=vmem, size = 0x12000, scoped, tag = 'internal scratch']
  %s0 = inlined_call_operand.vmem [shape: f32[64,32], index: 0, kind: input, shape index: {}]
  %s1 = inlined_call_operand.vmem [shape: bf16[32,32], index: 1, kind: input, shape index: {}]
  %s2 = inlined_call_operand.vmem [shape: f32[1,32], index: 2, kind: input, shape index: {}]
  %s3 = inlined_call_operand.vmem [shape: bf16[32,16], index: 3, kind: input, shape index: {}]
  %s4 = inlined_call_operand.vmem [shape: f32[1,16], index: 4, kind: input, shape index: {}]
  %s5 = inlined_call_operand.vmem [shape: bf16[16,48], index: 5, kind: input, shape index: {}]
  %s6 = inlined_call_operand.vmem [shape: f32[1,48], index: 6, kind: input, shape index: {}]
  %s7 = inlined_call_operand.vmem [shape: f32[64,48], index: 7, kind: output, shape index: {}]
  %s8 = sld [smem:[#allocation0]]
  $region61: #{tpu_custom_call.1} parent=0
    _
  %s10 = ssub.s32 1, %s8
  %s11 = scalar_select 0, %s10, %s8
  loop: start=0, step=1, limit=4
  $region2: #{tpu_custom_call.1} parent=0 // loop_pre_header
    _
  $region3: #{tpu_custom_call.1} parent=0 // loop_header
    %s13 = sphi 0, %s17
    %p14 = scmp.ge.s32.totalorder %s13, 4
    %s23 = sphi 0, %s25
    %s26 = sphi 0, %s23
    %s27 = sphi 0, %s26
    %s43 = sphi 0, %s27
    %s47 = sphi 0, %s47
    %s49 = sphi 0, %s47
    %s50 = sphi 0, %s49
    %s64 = sphi 0, %s50
    %s68 = sphi 0, %s68
    %s70 = sphi 0, %s68
    %s71 = sphi 0, %s70
    %s85 = sphi 0, %s71
    %s89 = sphi 0, %s89
    %s91 = sphi 0, %s89
    %s92 = sphi 0, %s91
    %s106 = sphi 0, %s92
    %s110 = sphi 0, %s110
    %s112 = sphi 0, %s110
    %s113 = sphi 0, %s112
    %s127 = sphi 0, %s113
    %s131 = sphi 0, %s131
    %s133 = sphi 0, %s131
    %s134 = sphi 0, %s133
    %s148 = sphi 0, %s134
    %s152 = sphi 0, %s152
    %s154 = sphi 0, %s152
    %s155 = sphi 0, %s154
    %s169 = sphi 0, %s155
    %s175 = sphi 0, %s177
    %s178 = sphi 0, %s175
    %s179 = sphi 0, %s178
    %s195 = sphi 0, %s179
  $region4: #{tpu_custom_call.1} parent=0 // loop_header_branch
    %16 = sbr.rel (%p14) target = $region8
  $region5: #{tpu_custom_call.1} parent=0 // loop_body
    %s18 = ssub.s32 %s13, 1
    %s19 = ssub.s32 %s13, 2
    %s20 = sadd.s32 %s13, 1
    %s21 = ssub.s32 %s13, %s20
    %p22 = scmp.eq.s32.totalorder %s21, 0
    %s24 = sadd.s32 %s23, 1
    %s25 = scalar_select %p22, %s23, %s24
    %p28 = pneg %p22
    %p29 = scmp.eq.s32.totalorder %s13, 1
    %p30 = por %p28, %p29
    %p31 = scmp.ne.s32.totalorder %s23, %s26
    %p32 = scmp.eq.s32.totalorder %s13, 0
    %p33 = por %p31, %p32
    %p34 = scmp.ne.s32.totalorder %s23, %s26
    %p35 = scmp.eq.s32.totalorder %s18, 1
    %p36 = por %p34, %p35
    %p37 = scmp.ne.s32.totalorder %s26, %s27
    %p38 = scmp.eq.s32.totalorder %s18, 0
    %p39 = por %p37, %p38
    %p40 = scmp.ne.s32.totalorder %s26, %s27
    %p41 = scmp.eq.s32.totalorder %s19, 1
    %p42 = por %p40, %p41
    %p44 = scmp.ne.s32.totalorder %s27, %s43
    %p45 = scmp.eq.s32.totalorder %s19, 0
    %p46 = por %p44, %p45
    %s48 = sadd.s32 %s47, 1
    %p51 = scmp.eq.s32.totalorder %s13, 1
    %p52 = scmp.ne.s32.totalorder %s47, %s49
    %p53 = scmp.eq.s32.totalorder %s13, 0
    %p54 = por %p52, %p53
    %p55 = scmp.ne.s32.totalorder %s47, %s49
    %p56 = scmp.eq.s32.totalorder %s18, 1
    %p57 = por %p55, %p56
    %p58 = scmp.ne.s32.totalorder %s49, %s50
    %p59 = scmp.eq.s32.totalorder %s18, 0
    %p60 = por %p58, %p59
    %p61 = scmp.ne.s32.totalorder %s49, %s50
    %p62 = scmp.eq.s32.totalorder %s19, 1
    %p63 = por %p61, %p62
    %p65 = scmp.ne.s32.totalorder %s50, %s64
    %p66 = scmp.eq.s32.totalorder %s19, 0
    %p67 = por %p65, %p66
    %s69 = sadd.s32 %s68, 1
    %p72 = scmp.eq.s32.totalorder %s13, 1
    %p73 = scmp.ne.s32.totalorder %s68, %s70
    %p74 = scmp.eq.s32.totalorder %s13, 0
    %p75 = por %p73, %p74
    %p76 = scmp.ne.s32.totalorder %s68, %s70
    %p77 = scmp.eq.s32.totalorder %s18, 1
    %p78 = por %p76, %p77
    %p79 = scmp.ne.s32.totalorder %s70, %s71
    %p80 = scmp.eq.s32.totalorder %s18, 0
    %p81 = por %p79, %p80
    %p82 = scmp.ne.s32.totalorder %s70, %s71
    %p83 = scmp.eq.s32.totalorder %s19, 1
    %p84 = por %p82, %p83
    %p86 = scmp.ne.s32.totalorder %s71, %s85
    %p87 = scmp.eq.s32.totalorder %s19, 0
    %p88 = por %p86, %p87
    %s90 = sadd.s32 %s89, 1
    %p93 = scmp.eq.s32.totalorder %s13, 1
    %p94 = scmp.ne.s32.totalorder %s89, %s91
    %p95 = scmp.eq.s32.totalorder %s13, 0
    %p96 = por %p94, %p95
    %p97 = scmp.ne.s32.totalorder %s89, %s91
    %p98 = scmp.eq.s32.totalorder %s18, 1
    %p99 = por %p97, %p98
    %p100 = scmp.ne.s32.totalorder %s91, %s92
    %p101 = scmp.eq.s32.totalorder %s18, 0
    %p102 = por %p100, %p101
    %p103 = scmp.ne.s32.totalorder %s91, %s92
    %p104 = scmp.eq.s32.totalorder %s19, 1
    %p105 = por %p103, %p104
    %p107 = scmp.ne.s32.totalorder %s92, %s106
    %p108 = scmp.eq.s32.totalorder %s19, 0
    %p109 = por %p107, %p108
    %s111 = sadd.s32 %s110, 1
    %p114 = scmp.eq.s32.totalorder %s13, 1
    %p115 = scmp.ne.s32.totalorder %s110, %s112
    %p116 = scmp.eq.s32.totalorder %s13, 0
    %p117 = por %p115, %p116
    %p118 = scmp.ne.s32.totalorder %s110, %s112
    %p119 = scmp.eq.s32.totalorder %s18, 1
    %p120 = por %p118, %p119
    %p121 = scmp.ne.s32.totalorder %s112, %s113
    %p122 = scmp.eq.s32.totalorder %s18, 0
    %p123 = por %p121, %p122
    %p124 = scmp.ne.s32.totalorder %s112, %s113
    %p125 = scmp.eq.s32.totalorder %s19, 1
    %p126 = por %p124, %p125
    %p128 = scmp.ne.s32.totalorder %s113, %s127
    %p129 = scmp.eq.s32.totalorder %s19, 0
    %p130 = por %p128, %p129
    %s132 = sadd.s32 %s131, 1
    %p135 = scmp.eq.s32.totalorder %s13, 1
    %p136 = scmp.ne.s32.totalorder %s131, %s133
    %p137 = scmp.eq.s32.totalorder %s13, 0
    %p138 = por %p136, %p137
    %p139 = scmp.ne.s32.totalorder %s131, %s133
    %p140 = scmp.eq.s32.totalorder %s18, 1
    %p141 = por %p139, %p140
    %p142 = scmp.ne.s32.totalorder %s133, %s134
    %p143 = scmp.eq.s32.totalorder %s18, 0
    %p144 = por %p142, %p143
    %p145 = scmp.ne.s32.totalorder %s133, %s134
    %p146 = scmp.eq.s32.totalorder %s19, 1
    %p147 = por %p145, %p146
    %p149 = scmp.ne.s32.totalorder %s134, %s148
    %p150 = scmp.eq.s32.totalorder %s19, 0
    %p151 = por %p149, %p150
    %s153 = sadd.s32 %s152, 1
    %p156 = scmp.eq.s32.totalorder %s13, 1
    %p157 = scmp.ne.s32.totalorder %s152, %s154
    %p158 = scmp.eq.s32.totalorder %s13, 0
    %p159 = por %p157, %p158
    %p160 = scmp.ne.s32.totalorder %s152, %s154
    %p161 = scmp.eq.s32.totalorder %s18, 1
    %p162 = por %p160, %p161
    %p163 = scmp.ne.s32.totalorder %s154, %s155
    %p164 = scmp.eq.s32.totalorder %s18, 0
    %p165 = por %p163, %p164
    %p166 = scmp.ne.s32.totalorder %s154, %s155
    %p167 = scmp.eq.s32.totalorder %s19, 1
    %p168 = por %p166, %p167
    %p170 = scmp.ne.s32.totalorder %s155, %s169
    %p171 = scmp.eq.s32.totalorder %s19, 0
    %p172 = por %p170, %p171
    %s173 = ssub.s32 %s13, %s20
    %p174 = scmp.eq.s32.totalorder %s173, 0
    %s176 = sadd.s32 %s175, 1
    %s177 = scalar_select %p174, %s175, %s176
    %p180 = pneg %p174
    %p181 = scmp.eq.s32.totalorder %s13, 1
    %p182 = por %p180, %p181
    %p183 = scmp.ne.s32.totalorder %s175, %s178
    %p184 = scmp.eq.s32.totalorder %s13, 0
    %p185 = por %p183, %p184
    %p186 = scmp.ne.s32.totalorder %s175, %s178
    %p187 = scmp.eq.s32.totalorder %s18, 1
    %p188 = por %p186, %p187
    %p189 = scmp.ne.s32.totalorder %s178, %s179
    %p190 = scmp.eq.s32.totalorder %s18, 0
    %p191 = por %p189, %p190
    %p192 = scmp.ne.s32.totalorder %s178, %s179
    %p193 = scmp.eq.s32.totalorder %s19, 1
    %p194 = por %p192, %p193
    %p196 = scmp.ne.s32.totalorder %s179, %s195
    %p197 = scmp.eq.s32.totalorder %s19, 0
    %p198 = por %p196, %p197
    %p199 = scmp.le.s32.totalorder 1, %s13
    %p200 = scmp.lt.s32.totalorder %s13, 3
    %p201 = pnand %p199, %p200
    %p202 = pneg %p201
    // Predicated region
    $region9: #{tpu_custom_call.1} parent=5 // pred_check
      _
    $region10: #{tpu_custom_call.1} parent=5 // pred_check_branch
      %204 = sbr.rel (%p201) target = $region12
    $region11: #{tpu_custom_call.1} parent=5 // pred_region
      %s205 = ssub.s32 %s13, 1
      // Predicated region
      $region13: #{tpu_custom_call.1} parent=11 // pred_check
        %p206 = pneg %p60
      $region14: #{tpu_custom_call.1} parent=11 // pred_check_branch
        %208 = sbr.rel (%p206) target = $region16
      $region15: #{tpu_custom_call.1} parent=11 // pred_region
        _
      $region16: #{tpu_custom_call.1} parent=11 // pred_fallthru
        _
      // Predicated region
      $region17: #{tpu_custom_call.1} parent=11 // pred_check
        %p209 = pneg %p81
      $region18: #{tpu_custom_call.1} parent=11 // pred_check_branch
        %211 = sbr.rel (%p209) target = $region20
      $region19: #{tpu_custom_call.1} parent=11 // pred_region
        _
      $region20: #{tpu_custom_call.1} parent=11 // pred_fallthru
        _
      // Predicated region
      $region21: #{tpu_custom_call.1} parent=11 // pred_check
        %p212 = pneg %p102
      $region22: #{tpu_custom_call.1} parent=11 // pred_check_branch
        %214 = sbr.rel (%p212) target = $region24
      $region23: #{tpu_custom_call.1} parent=11 // pred_region
        _
      $region24: #{tpu_custom_call.1} parent=11 // pred_fallthru
        _
      // Predicated region
      $region25: #{tpu_custom_call.1} parent=11 // pred_check
        %p215 = pneg %p123
      $region26: #{tpu_custom_call.1} parent=11 // pred_check_branch
        %217 = sbr.rel (%p215) target = $region28
      $region27: #{tpu_custom_call.1} parent=11 // pred_region
        _
      $region28: #{tpu_custom_call.1} parent=11 // pred_fallthru
        _
      // Predicated region
      $region29: #{tpu_custom_call.1} parent=11 // pred_check
        %p218 = pneg %p144
      $region30: #{tpu_custom_call.1} parent=11 // pred_check_branch
        %220 = sbr.rel (%p218) target = $region32
      $region31: #{tpu_custom_call.1} parent=11 // pred_region
        _
      $region32: #{tpu_custom_call.1} parent=11 // pred_fallthru
        _
      // Predicated region
      $region33: #{tpu_custom_call.1} parent=11 // pred_check
        %p221 = pneg %p165
      $region34: #{tpu_custom_call.1} parent=11 // pred_check_branch
        %223 = sbr.rel (%p221) target = $region36
      $region35: #{tpu_custom_call.1} parent=11 // pred_region
        _
      $region36: #{tpu_custom_call.1} parent=11 // pred_fallthru
        _
    $region12: #{tpu_custom_call.1} parent=5 // pred_fallthru
      _
    %p224 = scmp.lt.s32.totalorder %s13, 2
    // Predicated region
    $region37: #{tpu_custom_call.1} parent=5 // pred_check
      %p225 = pneg %p224
    $region38: #{tpu_custom_call.1} parent=5 // pred_check_branch
      %227 = sbr.rel (%p225) target = $region40
    $region39: #{tpu_custom_call.1} parent=5 // pred_region
      // Predicated region
      $region41: #{tpu_custom_call.1} parent=39 // pred_check
        %p228 = pneg %p33
      $region42: #{tpu_custom_call.1} parent=39 // pred_check_branch
        %230 = sbr.rel (%p228) target = $region44
      $region43: #{tpu_custom_call.1} parent=39 // pred_region
        %s231 = smul.u32 4, %s13
        %p232 = scmp.lt.s32.totalorder %s231, 7
        %s233 = scalar_select %p232, %s231, 7
        %s234 = smul.addr %s233, 8
        %s235 = scalar_lea.vmem %s0, %s234
        %s236 = smul.u32 4, %s13
      $region44: #{tpu_custom_call.1} parent=39 // pred_fallthru
        _
    $region40: #{tpu_custom_call.1} parent=5 // pred_fallthru
      _
    %p237 = scmp.le.s32.totalorder 1, %s13
    %p238 = scmp.lt.s32.totalorder %s13, 3
    %p239 = pnand %p237, %p238
    %p240 = pneg %p239
    // Predicated region
    $region45: #{tpu_custom_call.1} parent=5 // pred_check
      _
    $region46: #{tpu_custom_call.1} parent=5 // pred_check_branch
      %242 = sbr.rel (%p239) target = $region48
    $region47: #{tpu_custom_call.1} parent=5 // pred_region
      %s243 = ssub.s32 %s13, 1
      %s244 = smul.u32 4, %s18
      %p245 = scmp.lt.s32.totalorder %s244, 7
      %s246 = scalar_select %p245, %s244, 7
      %s247 = smul.addr %s246, 8
      %s248 = scalar_lea.vmem %s0, %s247
      %p249 = pneg %p39
      %p250 = pneg %p36
      %p251 = pneg %p60
      %p252 = pneg %p57
      %p253 = pneg %p81
      %p254 = pneg %p78
      %p255 = pneg %p102
      %p256 = pneg %p99
      %p257 = pneg %p123
      %p258 = pneg %p120
      %p259 = pneg %p144
      %p260 = pneg %p141
      %p261 = pneg %p165
      %p262 = pneg %p162
      %p263 = pneg %p191
      %p264 = pneg %p188
      %s265 = smul.u32 4, %s18
      %p266 = scmp.lt.s32.totalorder %s265, 7
      %s267 = scalar_select %p266, %s265, 7
      %s268 = smul.addr %s267, 8
      %s269 = scalar_lea.vmem %s7, %s268
      %s270 = smul.u32 4, %s18
      %p271 = scmp.lt.s32.totalorder %s270, 7
      %s272 = scalar_select %p271, %s270, 7
      %s273 = smul.addr %s272, 8
      %s274 = scalar_lea.vmem %s0, %s273
      %s275 = smul.u32 4, %s18
      %s276 = smul.u32 4, %s18
      %p277 = scmp.lt.s32.totalorder %s276, 7
      %s278 = scalar_select %p277, %s276, 7
      %s279 = smul.addr %s278, 8
      %s280 = scalar_lea.vmem %s7, %s279
      %s281 = smul.u32 4, %s18
      %v283 = vld [vmem:[%s274] sm:$0xff]
      %v284 = vld [vmem:[%s274 + $0x8] sm:$0xff]
      %v285 = vld [vmem:[%s274 + $0x10] sm:$0xff]
      %v286 = vld [vmem:[%s274 + $0x18] sm:$0xff]
      %v287 = vpack.c.bf16 %v284, %v283
      %v288 = vpack.c.bf16 %v286, %v285
      %v289 = vld [vmem:[%s1] sm:$0xf]
      %v290 = vld [vmem:[%s1 + $0x4] sm:$0xf]
      %v291 = vld [vmem:[%s1 + $0x8] sm:$0xf]
      %v292 = vld [vmem:[%s1 + $0xc] sm:$0xf]
      %v293 = vld [vmem:[%s2] sm:$0x1]
      %v295 = vlaneseq
      %v296 = vshrl.u32 %v295, 7
      %v297 = vsub.s32 0, %v296
      %v298 = vrot.slane %v293, %v297
      %v304 = vunpack.c.l.b16 %v289
      %v305 = vunpack.c.l.b16 %v290
      %v306 = vunpack.c.l.b16 %v291
      %v307 = vunpack.c.l.b16 %v292
      %v308 = vpack.c.b16 %v305, %v304
      %v309 = vpack.c.b16 %v307, %v306
      %vm312 = vcmask 261120
      %v314 = vsel %vm312, %v287, 0
      %v317 = vsel %vm312, %v288, 0
      %319 = vmatprep.subr.bf16.mxu0 0
      %320 = vmatpush1.bf16.msra.mxu0 %v308
      %321 = vmatprep.subr.bf16.mxu0 0
      %322 = vmatpush1.bf16.msra.mxu0 %v309
      %323 = vmatprep.subr.bf16.mxu0 0
      %324 = vmatpush1.bf16.msra.mxu0 0
      %325 = vmatprep.subr.bf16.mxu0 0
      %326 = vmatpush1.bf16.msra.mxu0 0
      %327 = vmatprep.subr.bf16.mxu0 0
      %328 = vmatpush1.bf16.msra.mxu0 0
      %329 = vmatprep.subr.bf16.mxu0 0
      %330 = vmatpush1.bf16.msra.mxu0 0
      %331 = vmatprep.subr.bf16.mxu0 0
      %332 = vmatpush1.bf16.msra.mxu0 0
      %333 = vmatprep.subr.bf16.mxu0 0
      %334 = vmatpush1.bf16.msra.mxu0 0
      %335 = vmatprep.subr.bf16.mxu0 0
      %336 = vmatpush1.bf16.msra.mxu0 0
      %337 = vmatprep.subr.bf16.mxu0 0
      %338 = vmatpush1.bf16.msra.mxu0 0
      %339 = vmatprep.subr.bf16.mxu0 0
      %340 = vmatpush1.bf16.msra.mxu0 0
      %341 = vmatprep.subr.bf16.mxu0 0
      %342 = vmatpush1.bf16.msra.mxu0 0
      %343 = vmatprep.subr.bf16.mxu0 0
      %344 = vmatpush1.bf16.msra.mxu0 0
      %345 = vmatprep.subr.bf16.mxu0 0
      %346 = vmatpush1.bf16.msra.mxu0 0
      %347 = vmatprep.subr.bf16.mxu0 0
      %348 = vmatpush1.bf16.msra.mxu0 0
      %349 = vmatprep.subr.bf16.mxu0 0
      %350 = vmatpush1.bf16.msra.mxu0 0
      %351 = vmatprep.mubr.bf16.mxu0 0
      %352 = vmatmul.mubr.bf16.gmra.mrb[0].mxu0 %v314
      %v353 = vpop.f32.mrb[0].mxu0
      %v354 = vadd.f32 %v298, %v353
      %v355 = vpop.f32.mrb[0].mxu0
      %v356 = vpop.f32.mrb[0].mxu0
      %v357 = vadd.f32 %v298, %v356
      %v358 = vpop.f32.mrb[0].mxu0
      %359 = vmatprep.mubr.bf16.mxu0 0
      %360 = vmatmul.mubr.bf16.gmra.mrb[0].mxu0 %v317
      %v361 = vpop.f32.mrb[0].mxu0
      %v362 = vadd.f32 %v298, %v361
      %v363 = vpop.f32.mrb[0].mxu0
      %v364 = vpop.f32.mrb[0].mxu0
      %v365 = vadd.f32 %v298, %v364
      %v366 = vpop.f32.mrb[0].mxu0
      %367 = vdwg.mxu0
      %v368 = vmax.f32 %v354, 0.0
      %v369 = vmax.f32 %v357, 0.0
      %v370 = vmax.f32 %v362, 0.0
      %v371 = vmax.f32 %v365, 0.0
      %v372 = vpack.c.bf16 %v369, %v368
      %v373 = vpack.c.bf16 %v371, %v370
      %v374 = vld [vmem:[%s3] sm:$0xf]
      %v375 = vld [vmem:[%s3 + $0x4] sm:$0xf]
      %v376 = vld [vmem:[%s3 + $0x8] sm:$0xf]
      %v377 = vld [vmem:[%s3 + $0xc] sm:$0xf]
      %v378 = vld [vmem:[%s4] sm:$0x1]
      %v380 = vlaneseq
      %v381 = vshrl.u32 %v380, 7
      %v382 = vsub.s32 0, %v381
      %v383 = vrot.slane %v378, %v382
      %v389 = vunpack.c.l.b16 %v374
      %v390 = vunpack.c.l.b16 %v375
      %v391 = vunpack.c.l.b16 %v376
      %v392 = vunpack.c.l.b16 %v377
      %v393 = vpack.c.b16 %v390, %v389
      %v394 = vpack.c.b16 %v392, %v391
      %v398 = vsel %vm312, %v372, 0
      %v401 = vsel %vm312, %v373, 0
      %403 = vmatprep.subr.bf16.mxu0 0
      %404 = vmatpush1.bf16.msra.mxu0 %v393
      %405 = vmatprep.subr.bf16.mxu0 0
      %406 = vmatpush1.bf16.msra.mxu0 %v394
      %407 = vmatprep.subr.bf16.mxu0 0
      %408 = vmatpush1.bf16.msra.mxu0 0
      %409 = vmatprep.subr.bf16.mxu0 0
      %410 = vmatpush1.bf16.msra.mxu0 0
      %411 = vmatprep.subr.bf16.mxu0 0
      %412 = vmatpush1.bf16.msra.mxu0 0
      %413 = vmatprep.subr.bf16.mxu0 0
      %414 = vmatpush1.bf16.msra.mxu0 0
      %415 = vmatprep.subr.bf16.mxu0 0
      %416 = vmatpush1.bf16.msra.mxu0 0
      %417 = vmatprep.subr.bf16.mxu0 0
      %418 = vmatpush1.bf16.msra.mxu0 0
      %419 = vmatprep.subr.bf16.mxu0 0
      %420 = vmatpush1.bf16.msra.mxu0 0
      %421 = vmatprep.subr.bf16.mxu0 0
      %422 = vmatpush1.bf16.msra.mxu0 0
      %423 = vmatprep.subr.bf16.mxu0 0
      %424 = vmatpush1.bf16.msra.mxu0 0
      %425 = vmatprep.subr.bf16.mxu0 0
      %426 = vmatpush1.bf16.msra.mxu0 0
      %427 = vmatprep.subr.bf16.mxu0 0
      %428 = vmatpush1.bf16.msra.mxu0 0
      %429 = vmatprep.subr.bf16.mxu0 0
      %430 = vmatpush1.bf16.msra.mxu0 0
      %431 = vmatprep.subr.bf16.mxu0 0
      %432 = vmatpush1.bf16.msra.mxu0 0
      %433 = vmatprep.subr.bf16.mxu0 0
      %434 = vmatpush1.bf16.msra.mxu0 0
      %435 = vmatprep.mubr.bf16.mxu0 0
      %436 = vmatmul.mubr.bf16.gmra.mrb[0].mxu0 %v398
      %v437 = vpop.f32.mrb[0].mxu0
      %v438 = vadd.f32 %v383, %v437
      %v439 = vpop.f32.mrb[0].mxu0
      %v440 = vpop.f32.mrb[0].mxu0
      %v441 = vadd.f32 %v383, %v440
      %v442 = vpop.f32.mrb[0].mxu0
      %443 = vmatprep.mubr.bf16.mxu0 0
      %444 = vmatmul.mubr.bf16.gmra.mrb[0].mxu0 %v401
      %v445 = vpop.f32.mrb[0].mxu0
      %v446 = vadd.f32 %v383, %v445
      %v447 = vpop.f32.mrb[0].mxu0
      %v448 = vpop.f32.mrb[0].mxu0
      %v449 = vadd.f32 %v383, %v448
      %v450 = vpop.f32.mrb[0].mxu0
      %451 = vdwg.mxu0
      %v452 = vmax.f32 %v438, 0.0
      %v453 = vmax.f32 %v441, 0.0
      %v454 = vmax.f32 %v446, 0.0
      %v455 = vmax.f32 %v449, 0.0
      %v456 = vpack.c.bf16 %v453, %v452
      %v457 = vpack.c.bf16 %v455, %v454
      %v458 = vld [vmem:[%s5] sm:$0xf]
      %v459 = vld [vmem:[%s5 + $0x4] sm:$0xf]
      %v460 = vld [vmem:[%s6] sm:$0x1]
      %v462 = vlaneseq
      %v463 = vshrl.u32 %v462, 7
      %v464 = vsub.s32 0, %v463
      %v465 = vrot.slane %v460, %v464
      %v469 = vunpack.c.l.b16 %v458
      %v470 = vunpack.c.l.b16 %v459
      %v471 = vpack.c.b16 %v470, %v469
      %vm473 = vcmask 130048
      %v475 = vsel %vm473, %v456, 0
      %v478 = vsel %vm473, %v457, 0
      %480 = vmatprep.subr.bf16.mxu0 0
      %481 = vmatpush1.bf16.msra.mxu0 %v471
      %482 = vmatprep.subr.bf16.mxu0 0
      %483 = vmatpush1.bf16.msra.mxu0 0
      %484 = vmatprep.subr.bf16.mxu0 0
      %485 = vmatpush1.bf16.msra.mxu0 0
      %486 = vmatprep.subr.bf16.mxu0 0
      %487 = vmatpush1.bf16.msra.mxu0 0
      %488 = vmatprep.subr.bf16.mxu0 0
      %489 = vmatpush1.bf16.msra.mxu0 0
      %490 = vmatprep.subr.bf16.mxu0 0
      %491 = vmatpush1.bf16.msra.mxu0 0
      %492 = vmatprep.subr.bf16.mxu0 0
      %493 = vmatpush1.bf16.msra.mxu0 0
      %494 = vmatprep.subr.bf16.mxu0 0
      %495 = vmatpush1.bf16.msra.mxu0 0
      %496 = vmatprep.subr.bf16.mxu0 0
      %497 = vmatpush1.bf16.msra.mxu0 0
      %498 = vmatprep.subr.bf16.mxu0 0
      %499 = vmatpush1.bf16.msra.mxu0 0
      %500 = vmatprep.subr.bf16.mxu0 0
      %501 = vmatpush1.bf16.msra.mxu0 0
      %502 = vmatprep.subr.bf16.mxu0 0
      %503 = vmatpush1.bf16.msra.mxu0 0
      %504 = vmatprep.subr.bf16.mxu0 0
      %505 = vmatpush1.bf16.msra.mxu0 0
      %506 = vmatprep.subr.bf16.mxu0 0
      %507 = vmatpush1.bf16.msra.mxu0 0
      %508 = vmatprep.subr.bf16.mxu0 0
      %509 = vmatpush1.bf16.msra.mxu0 0
      %510 = vmatprep.subr.bf16.mxu0 0
      %511 = vmatpush1.bf16.msra.mxu0 0
      %512 = vmatprep.mubr.bf16.mxu0 0
      %513 = vmatmul.mubr.bf16.gmra.mrb[0].mxu0 %v475
      %v514 = vpop.f32.mrb[0].mxu0
      %v515 = vadd.f32 %v465, %v514
      %v516 = vpop.f32.mrb[0].mxu0
      %v517 = vpop.f32.mrb[0].mxu0
      %v518 = vadd.f32 %v465, %v517
      %v519 = vpop.f32.mrb[0].mxu0
      %520 = vmatprep.mubr.bf16.mxu0 0
      %521 = vmatmul.mubr.bf16.gmra.mrb[0].mxu0 %v478
      %v522 = vpop.f32.mrb[0].mxu0
      %v523 = vadd.f32 %v465, %v522
      %v524 = vpop.f32.mrb[0].mxu0
      %v525 = vpop.f32.mrb[0].mxu0
      %v526 = vadd.f32 %v465, %v525
      %v527 = vpop.f32.mrb[0].mxu0
      %528 = vdwg.mxu0
      %vm529 = vcmask 64512
      %v530 = vsel %vm529, %v515, -inf
      %531 = vmax.xlane.f32.xlu0 %v530
      %v532 = vpop.xlane.xlu0 %531
      %v533 = vsel %vm529, %v518, -inf
      %534 = vmax.xlane.f32.xlu0 %v533
      %v535 = vpop.xlane.xlu0 %534
      %v536 = vsel %vm529, %v523, -inf
      %537 = vmax.xlane.f32.xlu0 %v536
      %v538 = vpop.xlane.xlu0 %537
      %v539 = vsel %vm529, %v526, -inf
      %540 = vmax.xlane.f32.xlu0 %v539
      %v541 = vpop.xlane.xlu0 %540
      %vm542 = vcmask 130112
      %v543 = vsel %vm542, %v515, -inf
      %544 = vmax.xlane.f32.xlu0 %v543
      %v545 = vpop.xlane.xlu0 %544
      %v546 = vsel %vm542, %v518, -inf
      %547 = vmax.xlane.f32.xlu0 %v546
      %v548 = vpop.xlane.xlu0 %547
      %v549 = vsel %vm542, %v523, -inf
      %550 = vmax.xlane.f32.xlu0 %v549
      %v551 = vpop.xlane.xlu0 %550
      %v552 = vsel %vm542, %v526, -inf
      %553 = vmax.xlane.f32.xlu0 %v552
      %v554 = vpop.xlane.xlu0 %553
      %vm555 = vcmask 195712
      %v556 = vsel %vm555, %v515, -inf
      %557 = vmax.xlane.f32.xlu0 %v556
      %v558 = vpop.xlane.xlu0 %557
      %v559 = vsel %vm555, %v518, -inf
      %560 = vmax.xlane.f32.xlu0 %v559
      %v561 = vpop.xlane.xlu0 %560
      %v562 = vsel %vm555, %v523, -inf
      %563 = vmax.xlane.f32.xlu0 %v562
      %v564 = vpop.xlane.xlu0 %563
      %v565 = vsel %vm555, %v526, -inf
      %566 = vmax.xlane.f32.xlu0 %v565
      %v567 = vpop.xlane.xlu0 %566
      %vm568 = vcmask 261312
      %v569 = vsel %vm568, %v515, -inf
      %570 = vmax.xlane.f32.xlu0 %v569
      %v571 = vpop.xlane.xlu0 %570
      %v572 = vsel %vm568, %v518, -inf
      %573 = vmax.xlane.f32.xlu0 %v572
      %v574 = vpop.xlane.xlu0 %573
      %v575 = vsel %vm568, %v523, -inf
      %576 = vmax.xlane.f32.xlu0 %v575
      %v577 = vpop.xlane.xlu0 %576
      %v578 = vsel %vm568, %v526, -inf
      %579 = vmax.xlane.f32.xlu0 %v578
      %v580 = vpop.xlane.xlu0 %579
      %vm581 = vcmask 326912
      %v582 = vsel %vm581, %v515, -inf
      %583 = vmax.xlane.f32.xlu0 %v582
      %v584 = vpop.xlane.xlu0 %583
      %v585 = vsel %vm581, %v518, -inf
      %586 = vmax.xlane.f32.xlu0 %v585
      %v587 = vpop.xlane.xlu0 %586
      %v588 = vsel %vm581, %v523, -inf
      %589 = vmax.xlane.f32.xlu0 %v588
      %v590 = vpop.xlane.xlu0 %589
      %v591 = vsel %vm581, %v526, -inf
      %592 = vmax.xlane.f32.xlu0 %v591
      %v593 = vpop.xlane.xlu0 %592
      %vm594 = vcmask 392512
      %v595 = vsel %vm594, %v515, -inf
      %596 = vmax.xlane.f32.xlu0 %v595
      %v597 = vpop.xlane.xlu0 %596
      %v598 = vsel %vm594, %v518, -inf
      %599 = vmax.xlane.f32.xlu0 %v598
      %v600 = vpop.xlane.xlu0 %599
      %v601 = vsel %vm594, %v523, -inf
      %602 = vmax.xlane.f32.xlu0 %v601
      %v603 = vpop.xlane.xlu0 %602
      %v604 = vsel %vm594, %v526, -inf
      %605 = vmax.xlane.f32.xlu0 %v604
      %v606 = vpop.xlane.xlu0 %605
      %v607 = vsel %vm529, %v532, %v545
      %v608 = vsel %vm529, %v535, %v548
      %v609 = vsel %vm529, %v538, %v551
      %v610 = vsel %vm529, %v541, %v554
      %v611 = vsel %vm473, %v607, %v558
      %v612 = vsel %vm473, %v608, %v561
      %v613 = vsel %vm473, %v609, %v564
      %v614 = vsel %vm473, %v610, %v567
      %vm615 = vcmask 195584
      %v616 = vsel %vm615, %v611, %v571
      %v617 = vsel %vm615, %v612, %v574
      %v618 = vsel %vm615, %v613, %v577
      %v619 = vsel %vm615, %v614, %v580
      %v620 = vsel %vm312, %v616, %v584
      %v621 = vsel %vm312, %v617, %v587
      %v622 = vsel %vm312, %v618, %v590
      %v623 = vsel %vm312, %v619, %v593
      %vm624 = vcmask 326656
      %v625 = vsel %vm624, %v620, %v597
      %v626 = vsel %vm624, %v621, %v600
      %v627 = vsel %vm624, %v622, %v603
      %v628 = vsel %vm624, %v623, %v606
      %v629 = vsub.f32 %v515, %v625
      %v630 = vsub.f32 %v518, %v626
      %v631 = vsub.f32 %v523, %v627
      %v632 = vsub.f32 %v526, %v628
      %v633 = vmul.f32 %v629, 1.442695
      %v634 = vpow.pop %v633
      %v635 = vmul.f32 %v630, 1.442695
      %v636 = vpow.pop %v635
      %v637 = vmul.f32 %v631, 1.442695
      %v638 = vpow.pop %v637
      %v639 = vmul.f32 %v632, 1.442695
      %v640 = vpow.pop %v639
      %v641 = vsel %vm529, %v634, 0.0
      %642 = vadd.xlane.f32.xlu0 %v641
      %v643 = vpop.xlane.xlu0 %642
      %v644 = vsel %vm529, %v636, 0.0
      %645 = vadd.xlane.f32.xlu0 %v644
      %v646 = vpop.xlane.xlu0 %645
      %v647 = vsel %vm529, %v638, 0.0
      %648 = vadd.xlane.f32.xlu0 %v647
      %v649 = vpop.xlane.xlu0 %648
      %v650 = vsel %vm529, %v640, 0.0
      %651 = vadd.xlane.f32.xlu0 %v650
      %v652 = vpop.xlane.xlu0 %651
      %657 = vrot.lane.b32.xlu0 %v634, 120
      %v658 = vpop.permute.xlu0 %657
      %659 = vrot.lane.b32.xlu0 %v636, 120
      %v660 = vpop.permute.xlu0 %659
      %661 = vrot.lane.b32.xlu0 %v638, 120
      %v662 = vpop.permute.xlu0 %661
      %663 = vrot.lane.b32.xlu0 %v640, 120
      %v664 = vpop.permute.xlu0 %663
      %v669 = vsel %vm529, %v658, 0.0
      %670 = vadd.xlane.f32.xlu0 %v669
      %v671 = vpop.xlane.xlu0 %670
      %v672 = vsel %vm529, %v660, 0.0
      %673 = vadd.xlane.f32.xlu0 %v672
      %v674 = vpop.xlane.xlu0 %673
      %v675 = vsel %vm529, %v662, 0.0
      %676 = vadd.xlane.f32.xlu0 %v675
      %v677 = vpop.xlane.xlu0 %676
      %v678 = vsel %vm529, %v664, 0.0
      %679 = vadd.xlane.f32.xlu0 %v678
      %v680 = vpop.xlane.xlu0 %679
      %681 = vrot.lane.b32.xlu0 %v634, 112
      %v682 = vpop.permute.xlu0 %681
      %683 = vrot.lane.b32.xlu0 %v636, 112
      %v684 = vpop.permute.xlu0 %683
      %685 = vrot.lane.b32.xlu0 %v638, 112
      %v686 = vpop.permute.xlu0 %685
      %687 = vrot.lane.b32.xlu0 %v640, 112
      %v688 = vpop.permute.xlu0 %687
      %v693 = vsel %vm529, %v682, 0.0
      %694 = vadd.xlane.f32.xlu0 %v693
      %v695 = vpop.xlane.xlu0 %694
      %v696 = vsel %vm529, %v684, 0.0
      %697 = vadd.xlane.f32.xlu0 %v696
      %v698 = vpop.xlane.xlu0 %697
      %v699 = vsel %vm529, %v686, 0.0
      %700 = vadd.xlane.f32.xlu0 %v699
      %v701 = vpop.xlane.xlu0 %700
      %v702 = vsel %vm529, %v688, 0.0
      %703 = vadd.xlane.f32.xlu0 %v702
      %v704 = vpop.xlane.xlu0 %703
      %705 = vrot.lane.b32.xlu0 %v634, 104
      %v706 = vpop.permute.xlu0 %705
      %707 = vrot.lane.b32.xlu0 %v636, 104
      %v708 = vpop.permute.xlu0 %707
      %709 = vrot.lane.b32.xlu0 %v638, 104
      %v710 = vpop.permute.xlu0 %709
      %711 = vrot.lane.b32.xlu0 %v640, 104
      %v712 = vpop.permute.xlu0 %711
      %v717 = vsel %vm529, %v706, 0.0
      %718 = vadd.xlane.f32.xlu0 %v717
      %v719 = vpop.xlane.xlu0 %718
      %v720 = vsel %vm529, %v708, 0.0
      %721 = vadd.xlane.f32.xlu0 %v720
      %v722 = vpop.xlane.xlu0 %721
      %v723 = vsel %vm529, %v710, 0.0
      %724 = vadd.xlane.f32.xlu0 %v723
      %v725 = vpop.xlane.xlu0 %724
      %v726 = vsel %vm529, %v712, 0.0
      %727 = vadd.xlane.f32.xlu0 %v726
      %v728 = vpop.xlane.xlu0 %727
      %729 = vrot.lane.b32.xlu0 %v634, 96
      %v730 = vpop.permute.xlu0 %729
      %731 = vrot.lane.b32.xlu0 %v636, 96
      %v732 = vpop.permute.xlu0 %731
      %733 = vrot.lane.b32.xlu0 %v638, 96
      %v734 = vpop.permute.xlu0 %733
      %735 = vrot.lane.b32.xlu0 %v640, 96
      %v736 = vpop.permute.xlu0 %735
      %v741 = vsel %vm529, %v730, 0.0
      %742 = vadd.xlane.f32.xlu0 %v741
      %v743 = vpop.xlane.xlu0 %742
      %v744 = vsel %vm529, %v732, 0.0
      %745 = vadd.xlane.f32.xlu0 %v744
      %v746 = vpop.xlane.xlu0 %745
      %v747 = vsel %vm529, %v734, 0.0
      %748 = vadd.xlane.f32.xlu0 %v747
      %v749 = vpop.xlane.xlu0 %748
      %v750 = vsel %vm529, %v736, 0.0
      %751 = vadd.xlane.f32.xlu0 %v750
      %v752 = vpop.xlane.xlu0 %751
      %753 = vrot.lane.b32.xlu0 %v634, 88
      %v754 = vpop.permute.xlu0 %753
      %755 = vrot.lane.b32.xlu0 %v636, 88
      %v756 = vpop.permute.xlu0 %755
      %757 = vrot.lane.b32.xlu0 %v638, 88
      %v758 = vpop.permute.xlu0 %757
      %759 = vrot.lane.b32.xlu0 %v640, 88
      %v760 = vpop.permute.xlu0 %759
      %v765 = vsel %vm529, %v754, 0.0
      %766 = vadd.xlane.f32.xlu0 %v765
      %v767 = vpop.xlane.xlu0 %766
      %v768 = vsel %vm529, %v756, 0.0
      %769 = vadd.xlane.f32.xlu0 %v768
      %v770 = vpop.xlane.xlu0 %769
      %v771 = vsel %vm529, %v758, 0.0
      %772 = vadd.xlane.f32.xlu0 %v771
      %v773 = vpop.xlane.xlu0 %772
      %v774 = vsel %vm529, %v760, 0.0
      %775 = vadd.xlane.f32.xlu0 %v774
      %v776 = vpop.xlane.xlu0 %775
      %v777 = vsel %vm529, %v643, %v671
      %v778 = vsel %vm529, %v646, %v674
      %v779 = vsel %vm529, %v649, %v677
      %v780 = vsel %vm529, %v652, %v680
      %v781 = vsel %vm473, %v777, %v695
      %v782 = vsel %vm473, %v778, %v698
      %v783 = vsel %vm473, %v779, %v701
      %v784 = vsel %vm473, %v780, %v704
      %v785 = vsel %vm615, %v781, %v719
      %v786 = vsel %vm615, %v782, %v722
      %v787 = vsel %vm615, %v783, %v725
      %v788 = vsel %vm615, %v784, %v728
      %v789 = vsel %vm312, %v785, %v743
      %v790 = vsel %vm312, %v786, %v746
      %v791 = vsel %vm312, %v787, %v749
      %v792 = vsel %vm312, %v788, %v752
      %v793 = vsel %vm624, %v789, %v767
      %v794 = vsel %vm624, %v790, %v770
      %v795 = vsel %vm624, %v791, %v773
      %v796 = vsel %vm624, %v792, %v776
      %v797 = vrcp.pop %v793
      %v798 = vmul.f32 %v634, %v797
      %v799 = vrcp.pop %v794
      %v800 = vmul.f32 %v636, %v799
      %v801 = vrcp.pop %v795
      %v802 = vmul.f32 %v638, %v801
      %v803 = vrcp.pop %v796
      %v804 = vmul.f32 %v640, %v803
      %vm805 = vcmask 392192
      %806 = vst.msk [vmem:[%s280] sm:$0xff] %vm805, %v798
      %807 = vst.msk [vmem:[%s280 + $0x8] sm:$0xff] %vm805, %v800
      %808 = vst.msk [vmem:[%s280 + $0x10] sm:$0xff] %vm805, %v802
      %809 = vst.msk [vmem:[%s280 + $0x18] sm:$0xff] %vm805, %v804
      %s810 = smul.u32 4, %s18
      %p811 = scmp.lt.s32.totalorder %s810, 7
      %s812 = scalar_select %p811, %s810, 7
      %s813 = smul.addr %s812, 8
      %s814 = scalar_lea.vmem %s7, %s813
      // Predicated region
      $region49: #{tpu_custom_call.1} parent=47 // pred_check
        %p815 = pneg %p188
      $region50: #{tpu_custom_call.1} parent=47 // pred_check_branch
        %817 = sbr.rel (%p815) target = $region52
      $region51: #{tpu_custom_call.1} parent=47 // pred_region
        %s818 = smul.u32 4, %s18
      $region52: #{tpu_custom_call.1} parent=47 // pred_fallthru
        _
    $region48: #{tpu_custom_call.1} parent=5 // pred_fallthru
      _
    %p819 = scmp.le.s32.totalorder 2, %s13
    // Predicated region
    $region53: #{tpu_custom_call.1} parent=5 // pred_check
      %p820 = pneg %p819
    $region54: #{tpu_custom_call.1} parent=5 // pred_check_branch
      %822 = sbr.rel (%p820) target = $region56
    $region55: #{tpu_custom_call.1} parent=5 // pred_region
      %s823 = ssub.s32 %s13, 2
      // Predicated region
      $region57: #{tpu_custom_call.1} parent=55 // pred_check
        %p824 = pneg %p194
      $region58: #{tpu_custom_call.1} parent=55 // pred_check_branch
        %826 = sbr.rel (%p824) target = $region60
      $region59: #{tpu_custom_call.1} parent=55 // pred_region
        %s827 = smul.u32 4, %s19
        %p828 = scmp.lt.s32.totalorder %s827, 7
        %s829 = scalar_select %p828, %s827, 7
        %s830 = smul.addr %s829, 8
        %s831 = scalar_lea.vmem %s7, %s830
      $region60: #{tpu_custom_call.1} parent=55 // pred_fallthru
        _
    $region56: #{tpu_custom_call.1} parent=5 // pred_fallthru
      _
  $region6: #{tpu_custom_call.1} parent=0 // loop_footer
    %s17 = sadd.s32 1, %s13
  $region7: #{tpu_custom_call.1} parent=0 // loop_footer_branch
    %12 = sbr.rel target = $region3
  $region8: #{tpu_custom_call.1} parent=0 // loop_exit
    _

// kernel: tpu_custom_call.1
$region0: #{tpu_custom_call.1}
  #allocation0 [shape = 'u32[]', space=smem, size = 0x4, offset = 0x4, fixed_abs, tag = 'smem constant byte address 0x4 - core index']
  #allocation1 [shape = 'u32[144,128]{1,0:T(1,128)}', space=vmem, size = 0x12000, scoped, tag = 'internal scratch']
  %s0 = inlined_call_operand.vmem [shape: f32[64,32], index: 0, kind: input, shape index: {}]
  %s1 = inlined_call_operand.vmem [shape: bf16[32,32], index: 1, kind: input, shape index: {}]
  %s2 = inlined_call_operand.vmem [shape: f32[1,32], index: 2, kind: input, shape index: {}]
  %s3 = inlined_call_operand.vmem [shape: bf16[32,16], index: 3, kind: input, shape index: {}]
  %s4 = inlined_call_operand.vmem [shape: f32[1,16], index: 4, kind: input, shape index: {}]
  %s5 = inlined_call_operand.vmem [shape: bf16[16,48], index: 5, kind: input, shape index: {}]
  %s6 = inlined_call_operand.vmem [shape: f32[1,48], index: 6, kind: input, shape index: {}]
  %s7 = inlined_call_operand.vmem [shape: f32[64,48], index: 7, kind: output, shape index: {}]
  %s8 = sld [smem:[#allocation0]]
  $region61: #{tpu_custom_call.1} parent=0
    _
  %s10 = ssub.s32 1, %s8
  %s11 = scalar_select 0, %s10, %s8
  loop: start=0, step=1, limit=4
  $region2: #{tpu_custom_call.1} parent=0 // loop_pre_header
    _
  $region3: #{tpu_custom_call.1} parent=0 // loop_header
    %s13 = sphi 0, %s17
    %p14 = scmp.ge.s32.totalorder %s13, 4
    %s23 = sphi 0, %s25
    %s26 = sphi 0, %s23
    %s27 = sphi 0, %s26
    %s43 = sphi 0, %s27
    %s47 = sphi 0, %s47
    %s49 = sphi 0, %s47
    %s50 = sphi 0, %s49
    %s64 = sphi 0, %s50
    %s68 = sphi 0, %s68
    %s70 = sphi 0, %s68
    %s71 = sphi 0, %s70
    %s85 = sphi 0, %s71
    %s89 = sphi 0, %s89
    %s91 = sphi 0, %s89
    %s92 = sphi 0, %s91
    %s106 = sphi 0, %s92
    %s110 = sphi 0, %s110
    %s112 = sphi 0, %s110
    %s113 = sphi 0, %s112
    %s127 = sphi 0, %s113
    %s131 = sphi 0, %s131
    %s133 = sphi 0, %s131
    %s134 = sphi 0, %s133
    %s148 = sphi 0, %s134
    %s152 = sphi 0, %s152
    %s154 = sphi 0, %s152
    %s155 = sphi 0, %s154
    %s169 = sphi 0, %s155
    %s175 = sphi 0, %s177
    %s178 = sphi 0, %s175
    %s179 = sphi 0, %s178
    %s195 = sphi 0, %s179
  $region4: #{tpu_custom_call.1} parent=0 // loop_header_branch
    %16 = sbr.rel (%p14) target = $region8
  $region5: #{tpu_custom_call.1} parent=0 // loop_body
    %s18 = ssub.s32 %s13, 1
    %s19 = ssub.s32 %s13, 2
    %s20 = sadd.s32 %s13, 1
    %s21 = ssub.s32 %s13, %s20
    %p22 = scmp.eq.s32.totalorder %s21, 0
    %s24 = sadd.s32 %s23, 1
    %s25 = scalar_select %p22, %s23, %s24
    %p28 = pneg %p22
    %p29 = scmp.eq.s32.totalorder %s13, 1
    %p30 = por %p28, %p29
    %p31 = scmp.ne.s32.totalorder %s23, %s26
    %p32 = scmp.eq.s32.totalorder %s13, 0
    %p33 = por %p31, %p32
    %p34 = scmp.ne.s32.totalorder %s23, %s26
    %p35 = scmp.eq.s32.totalorder %s18, 1
    %p36 = por %p34, %p35
    %p37 = scmp.ne.s32.totalorder %s26, %s27
    %p38 = scmp.eq.s32.totalorder %s18, 0
    %p39 = por %p37, %p38
    %p40 = scmp.ne.s32.totalorder %s26, %s27
    %p41 = scmp.eq.s32.totalorder %s19, 1
    %p42 = por %p40, %p41
    %p44 = scmp.ne.s32.totalorder %s27, %s43
    %p45 = scmp.eq.s32.totalorder %s19, 0
    %p46 = por %p44, %p45
    %s48 = sadd.s32 %s47, 1
    %p51 = scmp.eq.s32.totalorder %s13, 1
    %p52 = scmp.ne.s32.totalorder %s47, %s49
    %p53 = scmp.eq.s32.totalorder %s13, 0
    %p54 = por %p52, %p53
    %p55 = scmp.ne.s32.totalorder %s47, %s49
    %p56 = scmp.eq.s32.totalorder %s18, 1
    %p57 = por %p55, %p56
    %p58 = scmp.ne.s32.totalorder %s49, %s50
    %p59 = scmp.eq.s32.totalorder %s18, 0
    %p60 = por %p58, %p59
    %p61 = scmp.ne.s32.totalorder %s49, %s50
    %p62 = scmp.eq.s32.totalorder %s19, 1
    %p63 = por %p61, %p62
    %p65 = scmp.ne.s32.totalorder %s50, %s64
    %p66 = scmp.eq.s32.totalorder %s19, 0
    %p67 = por %p65, %p66
    %s69 = sadd.s32 %s68, 1
    %p72 = scmp.eq.s32.totalorder %s13, 1
    %p73 = scmp.ne.s32.totalorder %s68, %s70
    %p74 = scmp.eq.s32.totalorder %s13, 0
    %p75 = por %p73, %p74
    %p76 = scmp.ne.s32.totalorder %s68, %s70
    %p77 = scmp.eq.s32.totalorder %s18, 1
    %p78 = por %p76, %p77
    %p79 = scmp.ne.s32.totalorder %s70, %s71
    %p80 = scmp.eq.s32.totalorder %s18, 0
    %p81 = por %p79, %p80
    %p82 = scmp.ne.s32.totalorder %s70, %s71
    %p83 = scmp.eq.s32.totalorder %s19, 1
    %p84 = por %p82, %p83
    %p86 = scmp.ne.s32.totalorder %s71, %s85
    %p87 = scmp.eq.s32.totalorder %s19, 0
    %p88 = por %p86, %p87
    %s90 = sadd.s32 %s89, 1
    %p93 = scmp.eq.s32.totalorder %s13, 1
    %p94 = scmp.ne.s32.totalorder %s89, %s91
    %p95 = scmp.eq.s32.totalorder %s13, 0
    %p96 = por %p94, %p95
    %p97 = scmp.ne.s32.totalorder %s89, %s91
    %p98 = scmp.eq.s32.totalorder %s18, 1
    %p99 = por %p97, %p98
    %p100 = scmp.ne.s32.totalorder %s91, %s92
    %p101 = scmp.eq.s32.totalorder %s18, 0
    %p102 = por %p100, %p101
    %p103 = scmp.ne.s32.totalorder %s91, %s92
    %p104 = scmp.eq.s32.totalorder %s19, 1
    %p105 = por %p103, %p104
    %p107 = scmp.ne.s32.totalorder %s92, %s106
    %p108 = scmp.eq.s32.totalorder %s19, 0
    %p109 = por %p107, %p108
    %s111 = sadd.s32 %s110, 1
    %p114 = scmp.eq.s32.totalorder %s13, 1
    %p115 = scmp.ne.s32.totalorder %s110, %s112
    %p116 = scmp.eq.s32.totalorder %s13, 0
    %p117 = por %p115, %p116
    %p118 = scmp.ne.s32.totalorder %s110, %s112
    %p119 = scmp.eq.s32.totalorder %s18, 1
    %p120 = por %p118, %p119
    %p121 = scmp.ne.s32.totalorder %s112, %s113
    %p122 = scmp.eq.s32.totalorder %s18, 0
    %p123 = por %p121, %p122
    %p124 = scmp.ne.s32.totalorder %s112, %s113
    %p125 = scmp.eq.s32.totalorder %s19, 1
    %p126 = por %p124, %p125
    %p128 = scmp.ne.s32.totalorder %s113, %s127
    %p129 = scmp.eq.s32.totalorder %s19, 0
    %p130 = por %p128, %p129
    %s132 = sadd.s32 %s131, 1
    %p135 = scmp.eq.s32.totalorder %s13, 1
    %p136 = scmp.ne.s32.totalorder %s131, %s133
    %p137 = scmp.eq.s32.totalorder %s13, 0
    %p138 = por %p136, %p137
    %p139 = scmp.ne.s32.totalorder %s131, %s133
    %p140 = scmp.eq.s32.totalorder %s18, 1
    %p141 = por %p139, %p140
    %p142 = scmp.ne.s32.totalorder %s133, %s134
    %p143 = scmp.eq.s32.totalorder %s18, 0
    %p144 = por %p142, %p143
    %p145 = scmp.ne.s32.totalorder %s133, %s134
    %p146 = scmp.eq.s32.totalorder %s19, 1
    %p147 = por %p145, %p146
    %p149 = scmp.ne.s32.totalorder %s134, %s148
    %p150 = scmp.eq.s32.totalorder %s19, 0
    %p151 = por %p149, %p150
    %s153 = sadd.s32 %s152, 1
    %p156 = scmp.eq.s32.totalorder %s13, 1
    %p157 = scmp.ne.s32.totalorder %s152, %s154
    %p158 = scmp.eq.s32.totalorder %s13, 0
    %p159 = por %p157, %p158
    %p160 = scmp.ne.s32.totalorder %s152, %s154
    %p161 = scmp.eq.s32.totalorder %s18, 1
    %p162 = por %p160, %p161
    %p163 = scmp.ne.s32.totalorder %s154, %s155
    %p164 = scmp.eq.s32.totalorder %s18, 0
    %p165 = por %p163, %p164
    %p166 = scmp.ne.s32.totalorder %s154, %s155
    %p167 = scmp.eq.s32.totalorder %s19, 1
    %p168 = por %p166, %p167
    %p170 = scmp.ne.s32.totalorder %s155, %s169
    %p171 = scmp.eq.s32.totalorder %s19, 0
    %p172 = por %p170, %p171
    %s173 = ssub.s32 %s13, %s20
    %p174 = scmp.eq.s32.totalorder %s173, 0
    %s176 = sadd.s32 %s175, 1
    %s177 = scalar_select %p174, %s175, %s176
    %p180 = pneg %p174
    %p181 = scmp.eq.s32.totalorder %s13, 1
    %p182 = por %p180, %p181
    %p183 = scmp.ne.s32.totalorder %s175, %s178
    %p184 = scmp.eq.s32.totalorder %s13, 0
    %p185 = por %p183, %p184
    %p186 = scmp.ne.s32.totalorder %s175, %s178
    %p187 = scmp.eq.s32.totalorder %s18, 1
    %p188 = por %p186, %p187
    %p189 = scmp.ne.s32.totalorder %s178, %s179
    %p190 = scmp.eq.s32.totalorder %s18, 0
    %p191 = por %p189, %p190
    %p192 = scmp.ne.s32.totalorder %s178, %s179
    %p193 = scmp.eq.s32.totalorder %s19, 1
    %p194 = por %p192, %p193
    %p196 = scmp.ne.s32.totalorder %s179, %s195
    %p197 = scmp.eq.s32.totalorder %s19, 0
    %p198 = por %p196, %p197
    %p199 = scmp.le.s32.totalorder 1, %s13
    %p200 = scmp.lt.s32.totalorder %s13, 3
    %p201 = pnand %p199, %p200
    %p202 = pneg %p201
    // Predicated region
    $region9: #{tpu_custom_call.1} parent=5 // pred_check
      _
    $region10: #{tpu_custom_call.1} parent=5 // pred_check_branch
      %204 = sbr.rel (%p201) target = $region12
    $region11: #{tpu_custom_call.1} parent=5 // pred_region
      %s205 = ssub.s32 %s13, 1
      // Predicated region
      $region13: #{tpu_custom_call.1} parent=11 // pred_check
        %p206 = pneg %p60
      $region14: #{tpu_custom_call.1} parent=11 // pred_check_branch
        %208 = sbr.rel (%p206) target = $region16
      $region15: #{tpu_custom_call.1} parent=11 // pred_region
        _
      $region16: #{tpu_custom_call.1} parent=11 // pred_fallthru
        _
      // Predicated region
      $region17: #{tpu_custom_call.1} parent=11 // pred_check
        %p209 = pneg %p81
      $region18: #{tpu_custom_call.1} parent=11 // pred_check_branch
        %211 = sbr.rel (%p209) target = $region20
      $region19: #{tpu_custom_call.1} parent=11 // pred_region
        _
      $region20: #{tpu_custom_call.1} parent=11 // pred_fallthru
        _
      // Predicated region
      $region21: #{tpu_custom_call.1} parent=11 // pred_check
        %p212 = pneg %p102
      $region22: #{tpu_custom_call.1} parent=11 // pred_check_branch
        %214 = sbr.rel (%p212) target = $region24
      $region23: #{tpu_custom_call.1} parent=11 // pred_region
        _
      $region24: #{tpu_custom_call.1} parent=11 // pred_fallthru
        _
      // Predicated region
      $region25: #{tpu_custom_call.1} parent=11 // pred_check
        %p215 = pneg %p123
      $region26: #{tpu_custom_call.1} parent=11 // pred_check_branch
        %217 = sbr.rel (%p215) target = $region28
      $region27: #{tpu_custom_call.1} parent=11 // pred_region
        _
      $region28: #{tpu_custom_call.1} parent=11 // pred_fallthru
        _
      // Predicated region
      $region29: #{tpu_custom_call.1} parent=11 // pred_check
        %p218 = pneg %p144
      $region30: #{tpu_custom_call.1} parent=11 // pred_check_branch
        %220 = sbr.rel (%p218) target = $region32
      $region31: #{tpu_custom_call.1} parent=11 // pred_region
        _
      $region32: #{tpu_custom_call.1} parent=11 // pred_fallthru
        _
      // Predicated region
      $region33: #{tpu_custom_call.1} parent=11 // pred_check
        %p221 = pneg %p165
      $region34: #{tpu_custom_call.1} parent=11 // pred_check_branch
        %223 = sbr.rel (%p221) target = $region36
      $region35: #{tpu_custom_call.1} parent=11 // pred_region
        _
      $region36: #{tpu_custom_call.1} parent=11 // pred_fallthru
        _
    $region12: #{tpu_custom_call.1} parent=5 // pred_fallthru
      _
    %p224 = scmp.lt.s32.totalorder %s13, 2
    // Predicated region
    $region37: #{tpu_custom_call.1} parent=5 // pred_check
      %p225 = pneg %p224
    $region38: #{tpu_custom_call.1} parent=5 // pred_check_branch
      %227 = sbr.rel (%p225) target = $region40
    $region39: #{tpu_custom_call.1} parent=5 // pred_region
      // Predicated region
      $region41: #{tpu_custom_call.1} parent=39 // pred_check
        %p228 = pneg %p33
      $region42: #{tpu_custom_call.1} parent=39 // pred_check_branch
        %230 = sbr.rel (%p228) target = $region44
      $region43: #{tpu_custom_call.1} parent=39 // pred_region
        %s231 = smul.u32 4, %s13
        %p232 = scmp.lt.s32.totalorder %s231, 7
        %s233 = scalar_select %p232, %s231, 7
        %s234 = smul.addr %s233, 8
        %s235 = scalar_lea.vmem %s0, %s234
        %s236 = smul.u32 4, %s13
      $region44: #{tpu_custom_call.1} parent=39 // pred_fallthru
        _
    $region40: #{tpu_custom_call.1} parent=5 // pred_fallthru
      _
    %p237 = scmp.le.s32.totalorder 1, %s13
    %p238 = scmp.lt.s32.totalorder %s13, 3
    %p239 = pnand %p237, %p238
    %p240 = pneg %p239
    // Predicated region
    $region45: #{tpu_custom_call.1} parent=5 // pred_check
      _
    $region46: #{tpu_custom_call.1} parent=5 // pred_check_branch
      %242 = sbr.rel (%p239) target = $region48
    $region47: #{tpu_custom_call.1} parent=5 // pred_region
      %s243 = ssub.s32 %s13, 1
      %s244 = smul.u32 4, %s18
      %p245 = scmp.lt.s32.totalorder %s244, 7
      %s246 = scalar_select %p245, %s244, 7
      %s247 = smul.addr %s246, 8
      %s248 = scalar_lea.vmem %s0, %s247
      %p249 = pneg %p39
      %p250 = pneg %p36
      %p251 = pneg %p60
      %p252 = pneg %p57
      %p253 = pneg %p81
      %p254 = pneg %p78
      %p255 = pneg %p102
      %p256 = pneg %p99
      %p257 = pneg %p123
      %p258 = pneg %p120
      %p259 = pneg %p144
      %p260 = pneg %p141
      %p261 = pneg %p165
      %p262 = pneg %p162
      %p263 = pneg %p191
      %p264 = pneg %p188
      %s265 = smul.u32 4, %s18
      %p266 = scmp.lt.s32.totalorder %s265, 7
      %s267 = scalar_select %p266, %s265, 7
      %s268 = smul.addr %s267, 8
      %s269 = scalar_lea.vmem %s7, %s268
      %s270 = smul.u32 4, %s18
      %p271 = scmp.lt.s32.totalorder %s270, 7
      %s272 = scalar_select %p271, %s270, 7
      %s273 = smul.addr %s272, 8
      %s274 = scalar_lea.vmem %s0, %s273
      %s275 = smul.u32 4, %s18
      %s276 = smul.u32 4, %s18
      %p277 = scmp.lt.s32.totalorder %s276, 7
      %s278 = scalar_select %p277, %s276, 7
      %s279 = smul.addr %s278, 8
      %s280 = scalar_lea.vmem %s7, %s279
      %s281 = smul.u32 4, %s18
      %v283 = vld [vmem:[%s274] sm:$0xff]
      %v284 = vld [vmem:[%s274 + $0x8] sm:$0xff]
      %v285 = vld [vmem:[%s274 + $0x10] sm:$0xff]
      %v286 = vld [vmem:[%s274 + $0x18] sm:$0xff]
      %v287 = vpack.c.bf16 %v284, %v283
      %v288 = vpack.c.bf16 %v286, %v285
      %v289 = vld [vmem:[%s1] sm:$0xf]
      %v290 = vld [vmem:[%s1 + $0x4] sm:$0xf]
      %v291 = vld [vmem:[%s1 + $0x8] sm:$0xf]
      %v292 = vld [vmem:[%s1 + $0xc] sm:$0xf]
      %v293 = vld [vmem:[%s2] sm:$0x1]
      %v295 = vlaneseq
      %v296 = vshrl.u32 %v295, 7
      %v297 = vsub.s32 0, %v296
      %v298 = vrot.slane %v293, %v297
      %v304 = vunpack.c.l.b16 %v289
      %v305 = vunpack.c.l.b16 %v290
      %v306 = vunpack.c.l.b16 %v291
      %v307 = vunpack.c.l.b16 %v292
      %v308 = vpack.c.b16 %v305, %v304
      %v309 = vpack.c.b16 %v307, %v306
      %vm312 = vcmask 261120
      %v314 = vsel %vm312, %v287, 0
      %v317 = vsel %vm312, %v288, 0
      %319 = vmatprep.subr.bf16.mxu0 0
      %320 = vmatpush1.bf16.msra.mxu0 %v308
      %321 = vmatprep.subr.bf16.mxu0 0
      %322 = vmatpush1.bf16.msra.mxu0 %v309
      %323 = vmatprep.subr.bf16.mxu0 0
      %324 = vmatpush1.bf16.msra.mxu0 0
      %325 = vmatprep.subr.bf16.mxu0 0
      %326 = vmatpush1.bf16.msra.mxu0 0
      %327 = vmatprep.subr.bf16.mxu0 0
      %328 = vmatpush1.bf16.msra.mxu0 0
      %329 = vmatprep.subr.bf16.mxu0 0
      %330 = vmatpush1.bf16.msra.mxu0 0
      %331 = vmatprep.subr.bf16.mxu0 0
      %332 = vmatpush1.bf16.msra.mxu0 0
      %333 = vmatprep.subr.bf16.mxu0 0
      %334 = vmatpush1.bf16.msra.mxu0 0
      %335 = vmatprep.subr.bf16.mxu0 0
      %336 = vmatpush1.bf16.msra.mxu0 0
      %337 = vmatprep.subr.bf16.mxu0 0
      %338 = vmatpush1.bf16.msra.mxu0 0
      %339 = vmatprep.subr.bf16.mxu0 0
      %340 = vmatpush1.bf16.msra.mxu0 0
      %341 = vmatprep.subr.bf16.mxu0 0
      %342 = vmatpush1.bf16.msra.mxu0 0
      %343 = vmatprep.subr.bf16.mxu0 0
      %344 = vmatpush1.bf16.msra.mxu0 0
      %345 = vmatprep.subr.bf16.mxu0 0
      %346 = vmatpush1.bf16.msra.mxu0 0
      %347 = vmatprep.subr.bf16.mxu0 0
      %348 = vmatpush1.bf16.msra.mxu0 0
      %349 = vmatprep.subr.bf16.mxu0 0
      %350 = vmatpush1.bf16.msra.mxu0 0
      %351 = vmatprep.mubr.bf16.mxu0 0
      %352 = vmatmul.mubr.bf16.gmra.mrb[0].mxu0 %v314
      %v353 = vpop.f32.mrb[0].mxu0
      %v354 = vadd.f32 %v298, %v353
      %v355 = vpop.f32.mrb[0].mxu0
      %v356 = vpop.f32.mrb[0].mxu0
      %v357 = vadd.f32 %v298, %v356
      %v358 = vpop.f32.mrb[0].mxu0
      %359 = vmatprep.mubr.bf16.mxu0 0
      %360 = vmatmul.mubr.bf16.gmra.mrb[0].mxu0 %v317
      %v361 = vpop.f32.mrb[0].mxu0
      %v362 = vadd.f32 %v298, %v361
      %v363 = vpop.f32.mrb[0].mxu0
      %v364 = vpop.f32.mrb[0].mxu0
      %v365 = vadd.f32 %v298, %v364
      %v366 = vpop.f32.mrb[0].mxu0
      %367 = vdwg.mxu0
      %v368 = vmax.f32 %v354, 0.0
      %v369 = vmax.f32 %v357, 0.0
      %v370 = vmax.f32 %v362, 0.0
      %v371 = vmax.f32 %v365, 0.0
      %v372 = vpack.c.bf16 %v369, %v368
      %v373 = vpack.c.bf16 %v371, %v370
      %v374 = vld [vmem:[%s3] sm:$0xf]
      %v375 = vld [vmem:[%s3 + $0x4] sm:$0xf]
      %v376 = vld [vmem:[%s3 + $0x8] sm:$0xf]
      %v377 = vld [vmem:[%s3 + $0xc] sm:$0xf]
      %v378 = vld [vmem:[%s4] sm:$0x1]
      %v380 = vlaneseq
      %v381 = vshrl.u32 %v380, 7
      %v382 = vsub.s32 0, %v381
      %v383 = vrot.slane %v378, %v382
      %v389 = vunpack.c.l.b16 %v374
      %v390 = vunpack.c.l.b16 %v375
      %v391 = vunpack.c.l.b16 %v376
      %v392 = vunpack.c.l.b16 %v377
      %v393 = vpack.c.b16 %v390, %v389
      %v394 = vpack.c.b16 %v392, %v391
      %v398 = vsel %vm312, %v372, 0
      %v401 = vsel %vm312, %v373, 0
      %403 = vmatprep.subr.bf16.mxu0 0
      %404 = vmatpush1.bf16.msra.mxu0 %v393
      %405 = vmatprep.subr.bf16.mxu0 0
      %406 = vmatpush1.bf16.msra.mxu0 %v394
      %407 = vmatprep.subr.bf16.mxu0 0
      %408 = vmatpush1.bf16.msra.mxu0 0
      %409 = vmatprep.subr.bf16.mxu0 0
      %410 = vmatpush1.bf16.msra.mxu0 0
      %411 = vmatprep.subr.bf16.mxu0 0
      %412 = vmatpush1.bf16.msra.mxu0 0
      %413 = vmatprep.subr.bf16.mxu0 0
      %414 = vmatpush1.bf16.msra.mxu0 0
      %415 = vmatprep.subr.bf16.mxu0 0
      %416 = vmatpush1.bf16.msra.mxu0 0
      %417 = vmatprep.subr.bf16.mxu0 0
      %418 = vmatpush1.bf16.msra.mxu0 0
      %419 = vmatprep.subr.bf16.mxu0 0
      %420 = vmatpush1.bf16.msra.mxu0 0
      %421 = vmatprep.subr.bf16.mxu0 0
      %422 = vmatpush1.bf16.msra.mxu0 0
      %423 = vmatprep.subr.bf16.mxu0 0
      %424 = vmatpush1.bf16.msra.mxu0 0
      %425 = vmatprep.subr.bf16.mxu0 0
      %426 = vmatpush1.bf16.msra.mxu0 0
      %427 = vmatprep.subr.bf16.mxu0 0
      %428 = vmatpush1.bf16.msra.mxu0 0
      %429 = vmatprep.subr.bf16.mxu0 0
      %430 = vmatpush1.bf16.msra.mxu0 0
      %431 = vmatprep.subr.bf16.mxu0 0
      %432 = vmatpush1.bf16.msra.mxu0 0
      %433 = vmatprep.subr.bf16.mxu0 0
      %434 = vmatpush1.bf16.msra.mxu0 0
      %435 = vmatprep.mubr.bf16.mxu0 0
      %436 = vmatmul.mubr.bf16.gmra.mrb[0].mxu0 %v398
      %v437 = vpop.f32.mrb[0].mxu0
      %v438 = vadd.f32 %v383, %v437
      %v439 = vpop.f32.mrb[0].mxu0
      %v440 = vpop.f32.mrb[0].mxu0
      %v441 = vadd.f32 %v383, %v440
      %v442 = vpop.f32.mrb[0].mxu0
      %443 = vmatprep.mubr.bf16.mxu0 0
      %444 = vmatmul.mubr.bf16.gmra.mrb[0].mxu0 %v401
      %v445 = vpop.f32.mrb[0].mxu0
      %v446 = vadd.f32 %v383, %v445
      %v447 = vpop.f32.mrb[0].mxu0
      %v448 = vpop.f32.mrb[0].mxu0
      %v449 = vadd.f32 %v383, %v448
      %v450 = vpop.f32.mrb[0].mxu0
      %451 = vdwg.mxu0
      %v452 = vmax.f32 %v438, 0.0
      %v453 = vmax.f32 %v441, 0.0
      %v454 = vmax.f32 %v446, 0.0
      %v455 = vmax.f32 %v449, 0.0
      %v456 = vpack.c.bf16 %v453, %v452
      %v457 = vpack.c.bf16 %v455, %v454
      %v458 = vld [vmem:[%s5] sm:$0xf]
      %v459 = vld [vmem:[%s5 + $0x4] sm:$0xf]
      %v460 = vld [vmem:[%s6] sm:$0x1]
      %v462 = vlaneseq
      %v463 = vshrl.u32 %v462, 7
      %v464 = vsub.s32 0, %v463
      %v465 = vrot.slane %v460, %v464
      %v469 = vunpack.c.l.b16 %v458
      %v470 = vunpack.c.l.b16 %v459
      %v471 = vpack.c.b16 %v470, %v469
      %vm473 = vcmask 130048
      %v475 = vsel %vm473, %v456, 0
      %v478 = vsel %vm473, %v457, 0
      %480 = vmatprep.subr.bf16.mxu0 0
      %481 = vmatpush1.bf16.msra.mxu0 %v471
      %482 = vmatprep.subr.bf16.mxu0 0
      %483 = vmatpush1.bf16.msra.mxu0 0
      %484 = vmatprep.subr.bf16.mxu0 0
      %485 = vmatpush1.bf16.msra.mxu0 0
      %486 = vmatprep.subr.bf16.mxu0 0
      %487 = vmatpush1.bf16.msra.mxu0 0
      %488 = vmatprep.subr.bf16.mxu0 0
      %489 = vmatpush1.bf16.msra.mxu0 0
      %490 = vmatprep.subr.bf16.mxu0 0
      %491 = vmatpush1.bf16.msra.mxu0 0
      %492 = vmatprep.subr.bf16.mxu0 0
      %493 = vmatpush1.bf16.msra.mxu0 0
      %494 = vmatprep.subr.bf16.mxu0 0
      %495 = vmatpush1.bf16.msra.mxu0 0
      %496 = vmatprep.subr.bf16.mxu0 0
      %497 = vmatpush1.bf16.msra.mxu0 0
      %498 = vmatprep.subr.bf16.mxu0 0
      %499 = vmatpush1.bf16.msra.mxu0 0
      %500 = vmatprep.subr.bf16.mxu0 0
      %501 = vmatpush1.bf16.msra.mxu0 0
      %502 = vmatprep.subr.bf16.mxu0 0
      %503 = vmatpush1.bf16.msra.mxu0 0
      %504 = vmatprep.subr.bf16.mxu0 0
      %505 = vmatpush1.bf16.msra.mxu0 0
      %506 = vmatprep.subr.bf16.mxu0 0
      %507 = vmatpush1.bf16.msra.mxu0 0
      %508 = vmatprep.subr.bf16.mxu0 0
      %509 = vmatpush1.bf16.msra.mxu0 0
      %510 = vmatprep.subr.bf16.mxu0 0
      %511 = vmatpush1.bf16.msra.mxu0 0
      %512 = vmatprep.mubr.bf16.mxu0 0
      %513 = vmatmul.mubr.bf16.gmra.mrb[0].mxu0 %v475
      %v514 = vpop.f32.mrb[0].mxu0
      %v515 = vadd.f32 %v465, %v514
      %v516 = vpop.f32.mrb[0].mxu0
      %v517 = vpop.f32.mrb[0].mxu0
      %v518 = vadd.f32 %v465, %v517
      %v519 = vpop.f32.mrb[0].mxu0
      %520 = vmatprep.mubr.bf16.mxu0 0
      %521 = vmatmul.mubr.bf16.gmra.mrb[0].mxu0 %v478
      %v522 = vpop.f32.mrb[0].mxu0
      %v523 = vadd.f32 %v465, %v522
      %v524 = vpop.f32.mrb[0].mxu0
      %v525 = vpop.f32.mrb[0].mxu0
      %v526 = vadd.f32 %v465, %v525
      %v527 = vpop.f32.mrb[0].mxu0
      %528 = vdwg.mxu0
      %vm529 = vcmask 64512
      %v530 = vsel %vm529, %v515, -inf
      %531 = vmax.xlane.f32.xlu0 %v530
      %v532 = vpop.xlane.xlu0 %531
      %v533 = vsel %vm529, %v518, -inf
      %534 = vmax.xlane.f32.xlu0 %v533
      %v535 = vpop.xlane.xlu0 %534
      %v536 = vsel %vm529, %v523, -inf
      %537 = vmax.xlane.f32.xlu0 %v536
      %v538 = vpop.xlane.xlu0 %537
      %v539 = vsel %vm529, %v526, -inf
      %540 = vmax.xlane.f32.xlu0 %v539
      %v541 = vpop.xlane.xlu0 %540
      %vm542 = vcmask 130112
      %v543 = vsel %vm542, %v515, -inf
      %544 = vmax.xlane.f32.xlu0 %v543
      %v545 = vpop.xlane.xlu0 %544
      %v546 = vsel %vm542, %v518, -inf
      %547 = vmax.xlane.f32.xlu0 %v546
      %v548 = vpop.xlane.xlu0 %547
      %v549 = vsel %vm542, %v523, -inf
      %550 = vmax.xlane.f32.xlu0 %v549
      %v551 = vpop.xlane.xlu0 %550
      %v552 = vsel %vm542, %v526, -inf
      %553 = vmax.xlane.f32.xlu0 %v552
      %v554 = vpop.xlane.xlu0 %553
      %vm555 = vcmask 195712
      %v556 = vsel %vm555, %v515, -inf
      %557 = vmax.xlane.f32.xlu0 %v556
      %v558 = vpop.xlane.xlu0 %557
      %v559 = vsel %vm555, %v518, -inf
      %560 = vmax.xlane.f32.xlu0 %v559
      %v561 = vpop.xlane.xlu0 %560
      %v562 = vsel %vm555, %v523, -inf
      %563 = vmax.xlane.f32.xlu0 %v562
      %v564 = vpop.xlane.xlu0 %563
      %v565 = vsel %vm555, %v526, -inf
      %566 = vmax.xlane.f32.xlu0 %v565
      %v567 = vpop.xlane.xlu0 %566
      %vm568 = vcmask 261312
      %v569 = vsel %vm568, %v515, -inf
      %570 = vmax.xlane.f32.xlu0 %v569
      %v571 = vpop.xlane.xlu0 %570
      %v572 = vsel %vm568, %v518, -inf
      %573 = vmax.xlane.f32.xlu0 %v572
      %v574 = vpop.xlane.xlu0 %573
      %v575 = vsel %vm568, %v523, -inf
      %576 = vmax.xlane.f32.xlu0 %v575
      %v577 = vpop.xlane.xlu0 %576
      %v578 = vsel %vm568, %v526, -inf
      %579 = vmax.xlane.f32.xlu0 %v578
      %v580 = vpop.xlane.xlu0 %579
      %vm581 = vcmask 326912
      %v582 = vsel %vm581, %v515, -inf
      %583 = vmax.xlane.f32.xlu0 %v582
      %v584 = vpop.xlane.xlu0 %583
      %v585 = vsel %vm581, %v518, -inf
      %586 = vmax.xlane.f32.xlu0 %v585
      %v587 = vpop.xlane.xlu0 %586
      %v588 = vsel %vm581, %v523, -inf
      %589 = vmax.xlane.f32.xlu0 %v588
      %v590 = vpop.xlane.xlu0 %589
      %v591 = vsel %vm581, %v526, -inf
      %592 = vmax.xlane.f32.xlu0 %v591
      %v593 = vpop.xlane.xlu0 %592
      %vm594 = vcmask 392512
      %v595 = vsel %vm594, %v515, -inf
      %596 = vmax.xlane.f32.xlu0 %v595
      %v597 = vpop.xlane.xlu0 %596
      %v598 = vsel %vm594, %v518, -inf
      %599 = vmax.xlane.f32.xlu0 %v598
      %v600 = vpop.xlane.xlu0 %599
      %v601 = vsel %vm594, %v523, -inf
      %602 = vmax.xlane.f32.xlu0 %v601
      %v603 = vpop.xlane.xlu0 %602
      %v604 = vsel %vm594, %v526, -inf
      %605 = vmax.xlane.f32.xlu0 %v604
      %v606 = vpop.xlane.xlu0 %605
      %v607 = vsel %vm529, %v532, %v545
      %v608 = vsel %vm529, %v535, %v548
      %v609 = vsel %vm529, %v538, %v551
      %v610 = vsel %vm529, %v541, %v554
      %v611 = vsel %vm473, %v607, %v558
      %v612 = vsel %vm473, %v608, %v561
      %v613 = vsel %vm473, %v609, %v564
      %v614 = vsel %vm473, %v610, %v567
      %vm615 = vcmask 195584
      %v616 = vsel %vm615, %v611, %v571
      %v617 = vsel %vm615, %v612, %v574
      %v618 = vsel %vm615, %v613, %v577
      %v619 = vsel %vm615, %v614, %v580
      %v620 = vsel %vm312, %v616, %v584
      %v621 = vsel %vm312, %v617, %v587
      %v622 = vsel %vm312, %v618, %v590
      %v623 = vsel %vm312, %v619, %v593
      %vm624 = vcmask 326656
      %v625 = vsel %vm624, %v620, %v597
      %v626 = vsel %vm624, %v621, %v600
      %v627 = vsel %vm624, %v622, %v603
      %v628 = vsel %vm624, %v623, %v606
      %v629 = vsub.f32 %v515, %v625
      %v630 = vsub.f32 %v518, %v626
      %v631 = vsub.f32 %v523, %v627
      %v632 = vsub.f32 %v526, %v628
      %v633 = vmul.f32 %v629, 1.442695
      %v634 = vpow.pop %v633
      %v635 = vmul.f32 %v630, 1.442695
      %v636 = vpow.pop %v635
      %v637 = vmul.f32 %v631, 1.442695
      %v638 = vpow.pop %v637
      %v639 = vmul.f32 %v632, 1.442695
      %v640 = vpow.pop %v639
      %v641 = vsel %vm529, %v634, 0.0
      %642 = vadd.xlane.f32.xlu0 %v641
      %v643 = vpop.xlane.xlu0 %642
      %v644 = vsel %vm529, %v636, 0.0
      %645 = vadd.xlane.f32.xlu0 %v644
      %v646 = vpop.xlane.xlu0 %645
      %v647 = vsel %vm529, %v638, 0.0
      %648 = vadd.xlane.f32.xlu0 %v647
      %v649 = vpop.xlane.xlu0 %648
      %v650 = vsel %vm529, %v640, 0.0
      %651 = vadd.xlane.f32.xlu0 %v650
      %v652 = vpop.xlane.xlu0 %651
      %657 = vrot.lane.b32.xlu0 %v634, 120
      %v658 = vpop.permute.xlu0 %657
      %659 = vrot.lane.b32.xlu0 %v636, 120
      %v660 = vpop.permute.xlu0 %659
      %661 = vrot.lane.b32.xlu0 %v638, 120
      %v662 = vpop.permute.xlu0 %661
      %663 = vrot.lane.b32.xlu0 %v640, 120
      %v664 = vpop.permute.xlu0 %663
      %v669 = vsel %vm529, %v658, 0.0
      %670 = vadd.xlane.f32.xlu0 %v669
      %v671 = vpop.xlane.xlu0 %670
      %v672 = vsel %vm529, %v660, 0.0
      %673 = vadd.xlane.f32.xlu0 %v672
      %v674 = vpop.xlane.xlu0 %673
      %v675 = vsel %vm529, %v662, 0.0
      %676 = vadd.xlane.f32.xlu0 %v675
      %v677 = vpop.xlane.xlu0 %676
      %v678 = vsel %vm529, %v664, 0.0
      %679 = vadd.xlane.f32.xlu0 %v678
      %v680 = vpop.xlane.xlu0 %679
      %681 = vrot.lane.b32.xlu0 %v634, 112
      %v682 = vpop.permute.xlu0 %681
      %683 = vrot.lane.b32.xlu0 %v636, 112
      %v684 = vpop.permute.xlu0 %683
      %685 = vrot.lane.b32.xlu0 %v638, 112
      %v686 = vpop.permute.xlu0 %685
      %687 = vrot.lane.b32.xlu0 %v640, 112
      %v688 = vpop.permute.xlu0 %687
      %v693 = vsel %vm529, %v682, 0.0
      %694 = vadd.xlane.f32.xlu0 %v693
      %v695 = vpop.xlane.xlu0 %694
      %v696 = vsel %vm529, %v684, 0.0
      %697 = vadd.xlane.f32.xlu0 %v696
      %v698 = vpop.xlane.xlu0 %697
      %v699 = vsel %vm529, %v686, 0.0
      %700 = vadd.xlane.f32.xlu0 %v699
      %v701 = vpop.xlane.xlu0 %700
      %v702 = vsel %vm529, %v688, 0.0
      %703 = vadd.xlane.f32.xlu0 %v702
      %v704 = vpop.xlane.xlu0 %703
      %705 = vrot.lane.b32.xlu0 %v634, 104
      %v706 = vpop.permute.xlu0 %705
      %707 = vrot.lane.b32.xlu0 %v636, 104
      %v708 = vpop.permute.xlu0 %707
      %709 = vrot.lane.b32.xlu0 %v638, 104
      %v710 = vpop.permute.xlu0 %709
      %711 = vrot.lane.b32.xlu0 %v640, 104
      %v712 = vpop.permute.xlu0 %711
      %v717 = vsel %vm529, %v706, 0.0
      %718 = vadd.xlane.f32.xlu0 %v717
      %v719 = vpop.xlane.xlu0 %718
      %v720 = vsel %vm529, %v708, 0.0
      %721 = vadd.xlane.f32.xlu0 %v720
      %v722 = vpop.xlane.xlu0 %721
      %v723 = vsel %vm529, %v710, 0.0
      %724 = vadd.xlane.f32.xlu0 %v723
      %v725 = vpop.xlane.xlu0 %724
      %v726 = vsel %vm529, %v712, 0.0
      %727 = vadd.xlane.f32.xlu0 %v726
      %v728 = vpop.xlane.xlu0 %727
      %729 = vrot.lane.b32.xlu0 %v634, 96
      %v730 = vpop.permute.xlu0 %729
      %731 = vrot.lane.b32.xlu0 %v636, 96
      %v732 = vpop.permute.xlu0 %731
      %733 = vrot.lane.b32.xlu0 %v638, 96
      %v734 = vpop.permute.xlu0 %733
      %735 = vrot.lane.b32.xlu0 %v640, 96
      %v736 = vpop.permute.xlu0 %735
      %v741 = vsel %vm529, %v730, 0.0
      %742 = vadd.xlane.f32.xlu0 %v741
      %v743 = vpop.xlane.xlu0 %742
      %v744 = vsel %vm529, %v732, 0.0
      %745 = vadd.xlane.f32.xlu0 %v744
      %v746 = vpop.xlane.xlu0 %745
      %v747 = vsel %vm529, %v734, 0.0
      %748 = vadd.xlane.f32.xlu0 %v747
      %v749 = vpop.xlane.xlu0 %748
      %v750 = vsel %vm529, %v736, 0.0
      %751 = vadd.xlane.f32.xlu0 %v750
      %v752 = vpop.xlane.xlu0 %751
      %753 = vrot.lane.b32.xlu0 %v634, 88
      %v754 = vpop.permute.xlu0 %753
      %755 = vrot.lane.b32.xlu0 %v636, 88
      %v756 = vpop.permute.xlu0 %755
      %757 = vrot.lane.b32.xlu0 %v638, 88
      %v758 = vpop.permute.xlu0 %757
      %759 = vrot.lane.b32.xlu0 %v640, 88
      %v760 = vpop.permute.xlu0 %759
      %v765 = vsel %vm529, %v754, 0.0
      %766 = vadd.xlane.f32.xlu0 %v765
      %v767 = vpop.xlane.xlu0 %766
      %v768 = vsel %vm529, %v756, 0.0
      %769 = vadd.xlane.f32.xlu0 %v768
      %v770 = vpop.xlane.xlu0 %769
      %v771 = vsel %vm529, %v758, 0.0
      %772 = vadd.xlane.f32.xlu0 %v771
      %v773 = vpop.xlane.xlu0 %772
      %v774 = vsel %vm529, %v760, 0.0
      %775 = vadd.xlane.f32.xlu0 %v774
      %v776 = vpop.xlane.xlu0 %775
      %v777 = vsel %vm529, %v643, %v671
      %v778 = vsel %vm529, %v646, %v674
      %v779 = vsel %vm529, %v649, %v677
      %v780 = vsel %vm529, %v652, %v680
      %v781 = vsel %vm473, %v777, %v695
      %v782 = vsel %vm473, %v778, %v698
      %v783 = vsel %vm473, %v779, %v701
      %v784 = vsel %vm473, %v780, %v704
      %v785 = vsel %vm615, %v781, %v719
      %v786 = vsel %vm615, %v782, %v722
      %v787 = vsel %vm615, %v783, %v725
      %v788 = vsel %vm615, %v784, %v728
      %v789 = vsel %vm312, %v785, %v743
      %v790 = vsel %vm312, %v786, %v746
      %v791 = vsel %vm312, %v787, %v749
      %v792 = vsel %vm312, %v788, %v752
      %v793 = vsel %vm624, %v789, %v767
      %v794 = vsel %vm624, %v790, %v770
      %v795 = vsel %vm624, %v791, %v773
      %v796 = vsel %vm624, %v792, %v776
      %v797 = vrcp.pop %v793
      %v798 = vmul.f32 %v634, %v797
      %v799 = vrcp.pop %v794
      %v800 = vmul.f32 %v636, %v799
      %v801 = vrcp.pop %v795
      %v802 = vmul.f32 %v638, %v801
      %v803 = vrcp.pop %v796
      %v804 = vmul.f32 %v640, %v803
      %vm805 = vcmask 392192
      %806 = vst.msk [vmem:[%s280] sm:$0xff] %vm805, %v798
      %807 = vst.msk [vmem:[%s280 + $0x8] sm:$0xff] %vm805, %v800
      %808 = vst.msk [vmem:[%s280 + $0x10] sm:$0xff] %vm805, %v802
      %809 = vst.msk [vmem:[%s280 + $0x18] sm:$0xff] %vm805, %v804
      %s810 = smul.u32 4, %s18
      %p811 = scmp.lt.s32.totalorder %s810, 7
      %s812 = scalar_select %p811, %s810, 7
      %s813 = smul.addr %s812, 8
      %s814 = scalar_lea.vmem %s7, %s813
      // Predicated region
      $region49: #{tpu_custom_call.1} parent=47 // pred_check
        %p815 = pneg %p188
      $region50: #{tpu_custom_call.1} parent=47 // pred_check_branch
        %817 = sbr.rel (%p815) target = $region52
      $region51: #{tpu_custom_call.1} parent=47 // pred_region
        %s818 = smul.u32 4, %s18
      $region52: #{tpu_custom_call.1} parent=47 // pred_fallthru
        _
    $region48: #{tpu_custom_call.1} parent=5 // pred_fallthru
      _
    %p819 = scmp.le.s32.totalorder 2, %s13
    // Predicated region
    $region53: #{tpu_custom_call.1} parent=5 // pred_check
      %p820 = pneg %p819
    $region54: #{tpu_custom_call.1} parent=5 // pred_check_branch
      %822 = sbr.rel (%p820) target = $region56
    $region55: #{tpu_custom_call.1} parent=5 // pred_region
      %s823 = ssub.s32 %s13, 2
      // Predicated region
      $region57: #{tpu_custom_call.1} parent=55 // pred_check
        %p824 = pneg %p194
      $region58: #{tpu_custom_call.1} parent=55 // pred_check_branch
        %826 = sbr.rel (%p824) target = $region60
      $region59: #{tpu_custom_call.1} parent=55 // pred_region
        %s827 = smul.u32 4, %s19
        %p828 = scmp.lt.s32.totalorder %s827, 7
        %s829 = scalar_select %p828, %s827, 7
        %s830 = smul.addr %s829, 8
        %s831 = scalar_lea.vmem %s7, %s830
      $region60: #{tpu_custom_call.1} parent=55 // pred_fallthru
        _
    $region56: #{tpu_custom_call.1} parent=5 // pred_fallthru
      _
  $region6: #{tpu_custom_call.1} parent=0 // loop_footer
    %s17 = sadd.s32 1, %s13
  $region7: #{tpu_custom_call.1} parent=0 // loop_footer_branch
    %12 = sbr.rel target = $region3
  $region8: #{tpu_custom_call.1} parent=0 // loop_exit
    _

</llo_original>
